<compile_context>
chip_gen: v7x
topology: tpu7x:2x2x1
jax: 0.10.0
libtpu: 0.0.40
codegen_flags: <defaults>
</compile_context>

<pallas_src>
import jax
import jax.numpy as jnp
from jax import lax
from jax.experimental import pallas as pl
from jax.experimental.pallas import tpu as pltpu

TOP_K = 50        # vocab size
EMB = 32          # embedding_size
HID = 32          # hidden_size
NUM_CLASSES = 10
BATCH = 2
SEQ = 8
LN_EPS = 1e-5     # PyTorch nn.LayerNorm default


# ----------------------------------------------------------------------------
# Fused kernel: embedding gather + LSTM ('last') + LayerNorm/Linear/ReLU/Linear
# ----------------------------------------------------------------------------
def textrnn_kernel(ids_ref,                                     # VMEM [S*B, 1] int32 (time-major)
                   emb_ref, wih_ref, whh_ref, b_ref,            # VMEM weights
                   gamma_ref, beta_ref, w1_ref, b1_ref, w2_ref, b2_ref,
                   out_ref):                                    # VMEM [B, C]
    H = HID
    n_rows = SEQ * BATCH

    # --- Prologue: embedding gather as one-hot matmul + input projection -----
    ids = ids_ref[...]                                          # [S*B, 1] int32
    vocab_iota = lax.broadcasted_iota(jnp.int32, (n_rows, TOP_K), 1)
    onehot = (vocab_iota == ids).astype(jnp.float32)            # [S*B, V]
    x_emb = jnp.dot(onehot, emb_ref[...],
                    preferred_element_type=jnp.float32)         # [S*B, E]
    xp_all = jnp.dot(x_emb, wih_ref[...],
                     preferred_element_type=jnp.float32) + b_ref[...]  # [S*B, 4H]

    whh = whh_ref[...]                                          # [H, 4H], hoisted load

    h = jnp.zeros((BATCH, H), jnp.float32)
    c = jnp.zeros((BATCH, H), jnp.float32)

    # --- Statically unrolled recurrence (S = 8); only h @ W_hh is serial -----
    for t in range(SEQ):
        xp = xp_all[t * BATCH:(t + 1) * BATCH, :]               # static slice [B, 4H]
        gates = xp + jnp.dot(h, whh, preferred_element_type=jnp.float32)

        # Full-width transcendentals (EUP), then static lane slices.
        sg = jax.nn.sigmoid(gates)
        tg = jnp.tanh(gates)
        i_g = sg[:, 0 * H:1 * H]
        f_g = sg[:, 1 * H:2 * H]
        g_g = tg[:, 2 * H:3 * H]
        o_g = sg[:, 3 * H:4 * H]

        c = f_g * c + i_g * g_g
        h = o_g * jnp.tanh(c)

    # --- Classifier head on h_T (cat_type='last'); Dropout is identity (eval)
    mean = jnp.mean(h, axis=-1, keepdims=True)
    var = jnp.mean((h - mean) ** 2, axis=-1, keepdims=True)
    xn = (h - mean) * lax.rsqrt(var + LN_EPS)
    xn = xn * gamma_ref[...] + beta_ref[...]
    y = jnp.dot(xn, w1_ref[...], preferred_element_type=jnp.float32) + b1_ref[...]
    y = jnp.maximum(y, 0.0)
    out_ref[...] = jnp.dot(y, w2_ref[...], preferred_element_type=jnp.float32) + b2_ref[...]


def textrnn_forward(token_ids, params):
    """token_ids: [B, S] int32 -> logits [B, NUM_CLASSES]."""
    B, S = token_ids.shape
    assert (B, S) == (BATCH, SEQ)
    # Time-major flatten so each timestep's rows form a contiguous static slice.
    ids_flat = jnp.transpose(token_ids).reshape(SEQ * BATCH, 1)

    full = lambda shape: pl.BlockSpec(shape, lambda i: (0,) * len(shape))

    return pl.pallas_call(
        textrnn_kernel,
        out_shape=jax.ShapeDtypeStruct((BATCH, NUM_CLASSES), jnp.float32),
        grid=(1,),                                # everything fits in VMEM; one grid point
        in_specs=[
            full((SEQ * BATCH, 1)),               # token ids (time-major, int32)
            full((TOP_K, EMB)),                   # embedding table
            full((EMB, 4 * HID)),                 # W_ih^T
            full((HID, 4 * HID)),                 # W_hh^T
            full((1, 4 * HID)),                   # b_ih + b_hh
            full((1, HID)),                       # LN gamma
            full((1, HID)),                       # LN beta
            full((HID, HID)),                     # W1^T
            full((1, HID)),                       # b1
            full((HID, NUM_CLASSES)),             # W2^T
            full((1, NUM_CLASSES)),               # b2
        ],
        out_specs=pl.BlockSpec((BATCH, NUM_CLASSES), lambda i: (0, 0)),
        compiler_params=pltpu.CompilerParams(dimension_semantics=("arbitrary",)),
    )(ids_flat, params["embedding"], params["w_ih_t"], params["w_hh_t"],
      params["lstm_b"], params["ln_gamma"], params["ln_beta"],
      params["w1_t"], params["b1"], params["w2_t"], params["b2"])


# ----------------------------------------------------------------------------
# Pure-JAX reference (same math) for a correctness check.
# ----------------------------------------------------------------------------
def textrnn_reference(token_ids, params):
    emb = jnp.take(params["embedding"], token_ids, axis=0)     # [B, S, E]
    B = emb.shape[0]
    H = HID

    def step(carry, x_t):
        h, c = carry
        gates = x_t @ params["w_ih_t"] + h @ params["w_hh_t"] + params["lstm_b"][0]
        i_g, f_g, g_g, o_g = jnp.split(gates, 4, axis=-1)
        i_g, f_g, o_g = jax.nn.sigmoid(i_g), jax.nn.sigmoid(f_g), jax.nn.sigmoid(o_g)
        g_g = jnp.tanh(g_g)
        c = f_g * c + i_g * g_g
        h = o_g * jnp.tanh(c)
        return (h, c), None

    (h, _), _ = lax.scan(step, (jnp.zeros((B, H)), jnp.zeros((B, H))),
                         jnp.swapaxes(emb, 0, 1))
    mean = jnp.mean(h, axis=-1, keepdims=True)
    var = jnp.mean((h - mean) ** 2, axis=-1, keepdims=True)
    xn = (h - mean) * lax.rsqrt(var + LN_EPS)
    xn = xn * params["ln_gamma"][0] + params["ln_beta"][0]
    y = jnp.maximum(xn @ params["w1_t"] + params["b1"][0], 0.0)
    return y @ params["w2_t"] + params["b2"][0]


def init_params(key):
    ks = jax.random.split(key, 8)
    scale = 0.1
    return {
        "embedding": scale * jax.random.normal(ks[0], (TOP_K, EMB), jnp.float32),
        # PyTorch weight_ih_l0: [4H, E]; stored pre-transposed [E, 4H]
        "w_ih_t":    scale * jax.random.normal(ks[1], (EMB, 4 * HID), jnp.float32),
        # PyTorch weight_hh_l0: [4H, H]; stored pre-transposed [H, 4H]
        "w_hh_t":    scale * jax.random.normal(ks[2], (HID, 4 * HID), jnp.float32),
        # b_ih + b_hh folded into one bias row
        "lstm_b":    scale * jax.random.normal(ks[3], (1, 4 * HID), jnp.float32),
        "ln_gamma":  jnp.ones((1, HID), jnp.float32),
        "ln_beta":   jnp.zeros((1, HID), jnp.float32),
        "w1_t":      scale * jax.random.normal(ks[4], (HID, HID), jnp.float32),
        "b1":        scale * jax.random.normal(ks[5], (1, HID), jnp.float32),
        "w2_t":      scale * jax.random.normal(ks[6], (HID, NUM_CLASSES), jnp.float32),
        "b2":        scale * jax.random.normal(ks[7], (1, NUM_CLASSES), jnp.float32),
    }


if __name__ == "__main__":
    key = jax.random.PRNGKey(0)
    k_tok, k_par = jax.random.split(key)
    token_ids = jax.random.randint(k_tok, (BATCH, SEQ), 0, TOP_K, dtype=jnp.int32)
    params = init_params(k_par)

    logits = jax.block_until_ready(textrnn_forward(token_ids, params))
    ref = jax.block_until_ready(textrnn_reference(token_ids, params))

    assert logits.shape == (BATCH, NUM_CLASSES), logits.shape
    assert jnp.allclose(logits, ref, atol=1e-3, rtol=1e-3), (logits, ref)
    print("KERNEL_OK")
</pallas_src>

<mosaic_0001>
module attributes {stable_mosaic.version = 11 : i64} {
  func.func @textrnn_kernel(%arg0: i32, %arg1: memref<16x1xi32, #tpu.memory_space<vmem>>, %arg2: memref<50x32xf32, #tpu.memory_space<vmem>>, %arg3: memref<32x128xf32, #tpu.memory_space<vmem>>, %arg4: memref<32x128xf32, #tpu.memory_space<vmem>>, %arg5: memref<1x128xf32, #tpu.memory_space<vmem>>, %arg6: memref<1x32xf32, #tpu.memory_space<vmem>>, %arg7: memref<1x32xf32, #tpu.memory_space<vmem>>, %arg8: memref<32x32xf32, #tpu.memory_space<vmem>>, %arg9: memref<1x32xf32, #tpu.memory_space<vmem>>, %arg10: memref<32x10xf32, #tpu.memory_space<vmem>>, %arg11: memref<1x10xf32, #tpu.memory_space<vmem>>, %arg12: memref<2x10xf32, #tpu.memory_space<vmem>>) attributes {dimension_semantics = [#tpu.dimension_semantics<arbitrary>], iteration_bounds = array<i64: 1>, scalar_prefetch = 0 : i64, scratch_operands = 0 : i64, tpu.core_type = #tpu.core_type<tc>, window_params = [{pipeline_mode = #tpu.pipeline_mode<synchronous>, transform_indices = @transform_0, window_bounds = array<i64: 16, 1>}, {pipeline_mode = #tpu.pipeline_mode<synchronous>, transform_indices = @transform_1, window_bounds = array<i64: 50, 32>}, {pipeline_mode = #tpu.pipeline_mode<synchronous>, transform_indices = @transform_2, window_bounds = array<i64: 32, 128>}, {pipeline_mode = #tpu.pipeline_mode<synchronous>, transform_indices = @transform_3, window_bounds = array<i64: 32, 128>}, {pipeline_mode = #tpu.pipeline_mode<synchronous>, transform_indices = @transform_4, window_bounds = array<i64: 1, 128>}, {pipeline_mode = #tpu.pipeline_mode<synchronous>, transform_indices = @transform_5, window_bounds = array<i64: 1, 32>}, {pipeline_mode = #tpu.pipeline_mode<synchronous>, transform_indices = @transform_6, window_bounds = array<i64: 1, 32>}, {pipeline_mode = #tpu.pipeline_mode<synchronous>, transform_indices = @transform_7, window_bounds = array<i64: 32, 32>}, {pipeline_mode = #tpu.pipeline_mode<synchronous>, transform_indices = @transform_8, window_bounds = array<i64: 1, 32>}, {pipeline_mode = #tpu.pipeline_mode<synchronous>, transform_indices = @transform_9, window_bounds = array<i64: 32, 10>}, {pipeline_mode = #tpu.pipeline_mode<synchronous>, transform_indices = @transform_10, window_bounds = array<i64: 1, 10>}, {pipeline_mode = #tpu.pipeline_mode<synchronous>, transform_indices = @transform_11, window_bounds = array<i64: 2, 10>}]} {
    %c0 = arith.constant 0 : index
    %c0_0 = arith.constant 0 : index
    %0 = vector.load %arg1[%c0, %c0_0] : memref<16x1xi32, #tpu.memory_space<vmem>>, vector<16x1xi32>
    %1 = tpu.iota {dimensions = array<i32: 1>} : vector<16x50xi32>
    %2 = vector.broadcast %0 : vector<16x1xi32> to vector<16x50xi32>
    %3 = arith.cmpi eq, %1, %2 : vector<16x50xi32>
    %4 = arith.extui %3 : vector<16x50xi1> to vector<16x50xi32>
    %5 = arith.sitofp %4 : vector<16x50xi32> to vector<16x50xf32>
    %c0_1 = arith.constant 0 : index
    %c0_2 = arith.constant 0 : index
    %6 = vector.load %arg2[%c0_1, %c0_2] : memref<50x32xf32, #tpu.memory_space<vmem>>, vector<50x32xf32>
    %cst = arith.constant dense<0.000000e+00> : vector<16x32xf32>
    %7 = tpu.matmul %5, %6, %cst {dimension_numbers = #tpu.dot_dimension_numbers<[1], [0], [0], [1], [0, 0, 1, 1], [], []>} : vector<16x50xf32>, vector<50x32xf32>, vector<16x32xf32> -> vector<16x32xf32>
    %c0_3 = arith.constant 0 : index
    %c0_4 = arith.constant 0 : index
    %8 = vector.load %arg3[%c0_3, %c0_4] : memref<32x128xf32, #tpu.memory_space<vmem>>, vector<32x128xf32>
    %cst_5 = arith.constant dense<0.000000e+00> : vector<16x128xf32>
    %9 = tpu.matmul %7, %8, %cst_5 {dimension_numbers = #tpu.dot_dimension_numbers<[1], [0], [0], [1], [0, 0, 1, 1], [], []>} : vector<16x32xf32>, vector<32x128xf32>, vector<16x128xf32> -> vector<16x128xf32>
    %c0_6 = arith.constant 0 : index
    %c0_7 = arith.constant 0 : index
    %10 = vector.load %arg5[%c0_6, %c0_7] : memref<1x128xf32, #tpu.memory_space<vmem>>, vector<1x128xf32>
    %11 = vector.broadcast %10 : vector<1x128xf32> to vector<16x128xf32>
    %12 = arith.addf %9, %11 : vector<16x128xf32>
    %c0_8 = arith.constant 0 : index
    %c0_9 = arith.constant 0 : index
    %13 = vector.load %arg4[%c0_8, %c0_9] : memref<32x128xf32, #tpu.memory_space<vmem>>, vector<32x128xf32>
    %cst_10 = arith.constant 0.000000e+00 : f32
    %14 = vector.broadcast %cst_10 : f32 to vector<2x32xf32>
    %cst_11 = arith.constant 0.000000e+00 : f32
    %15 = vector.broadcast %cst_11 : f32 to vector<2x32xf32>
    %16 = vector.extract_strided_slice %12 {offsets = [0, 0], sizes = [2, 128], strides = [1, 1]} : vector<16x128xf32> to vector<2x128xf32>
    %cst_12 = arith.constant dense<0.000000e+00> : vector<2x128xf32>
    %17 = tpu.matmul %14, %13, %cst_12 {dimension_numbers = #tpu.dot_dimension_numbers<[1], [0], [0], [1], [0, 0, 1, 1], [], []>} : vector<2x32xf32>, vector<32x128xf32>, vector<2x128xf32> -> vector<2x128xf32>
    %18 = arith.addf %16, %17 : vector<2x128xf32>
    %19 = arith.negf %18 : vector<2x128xf32>
    %20 = math.exp %19 : vector<2x128xf32>
    %cst_13 = arith.constant 1.000000e+00 : f32
    %21 = vector.broadcast %cst_13 : f32 to vector<2x128xf32>
    %22 = arith.addf %21, %20 : vector<2x128xf32>
    %23 = arith.divf %21, %22 : vector<2x128xf32>
    %24 = math.tanh %18 : vector<2x128xf32>
    %25 = vector.extract_strided_slice %23 {offsets = [0, 0], sizes = [2, 32], strides = [1, 1]} : vector<2x128xf32> to vector<2x32xf32>
    %26 = vector.extract_strided_slice %23 {offsets = [0, 32], sizes = [2, 32], strides = [1, 1]} : vector<2x128xf32> to vector<2x32xf32>
    %27 = vector.extract_strided_slice %24 {offsets = [0, 64], sizes = [2, 32], strides = [1, 1]} : vector<2x128xf32> to vector<2x32xf32>
    %28 = vector.extract_strided_slice %23 {offsets = [0, 96], sizes = [2, 32], strides = [1, 1]} : vector<2x128xf32> to vector<2x32xf32>
    %29 = arith.mulf %26, %15 : vector<2x32xf32>
    %30 = arith.mulf %25, %27 : vector<2x32xf32>
    %31 = arith.addf %29, %30 : vector<2x32xf32>
    %32 = math.tanh %31 : vector<2x32xf32>
    %33 = arith.mulf %28, %32 : vector<2x32xf32>
    %34 = vector.extract_strided_slice %12 {offsets = [2, 0], sizes = [2, 128], strides = [1, 1]} : vector<16x128xf32> to vector<2x128xf32>
    %cst_14 = arith.constant dense<0.000000e+00> : vector<2x128xf32>
    %35 = tpu.matmul %33, %13, %cst_14 {dimension_numbers = #tpu.dot_dimension_numbers<[1], [0], [0], [1], [0, 0, 1, 1], [], []>} : vector<2x32xf32>, vector<32x128xf32>, vector<2x128xf32> -> vector<2x128xf32>
    %36 = arith.addf %34, %35 : vector<2x128xf32>
    %37 = arith.negf %36 : vector<2x128xf32>
    %38 = math.exp %37 : vector<2x128xf32>
    %cst_15 = arith.constant 1.000000e+00 : f32
    %39 = vector.broadcast %cst_15 : f32 to vector<2x128xf32>
    %40 = arith.addf %39, %38 : vector<2x128xf32>
    %41 = arith.divf %39, %40 : vector<2x128xf32>
    %42 = math.tanh %36 : vector<2x128xf32>
    %43 = vector.extract_strided_slice %41 {offsets = [0, 0], sizes = [2, 32], strides = [1, 1]} : vector<2x128xf32> to vector<2x32xf32>
    %44 = vector.extract_strided_slice %41 {offsets = [0, 32], sizes = [2, 32], strides = [1, 1]} : vector<2x128xf32> to vector<2x32xf32>
    %45 = vector.extract_strided_slice %42 {offsets = [0, 64], sizes = [2, 32], strides = [1, 1]} : vector<2x128xf32> to vector<2x32xf32>
    %46 = vector.extract_strided_slice %41 {offsets = [0, 96], sizes = [2, 32], strides = [1, 1]} : vector<2x128xf32> to vector<2x32xf32>
    %47 = arith.mulf %44, %31 : vector<2x32xf32>
    %48 = arith.mulf %43, %45 : vector<2x32xf32>
    %49 = arith.addf %47, %48 : vector<2x32xf32>
    %50 = math.tanh %49 : vector<2x32xf32>
    %51 = arith.mulf %46, %50 : vector<2x32xf32>
    %52 = vector.extract_strided_slice %12 {offsets = [4, 0], sizes = [2, 128], strides = [1, 1]} : vector<16x128xf32> to vector<2x128xf32>
    %cst_16 = arith.constant dense<0.000000e+00> : vector<2x128xf32>
    %53 = tpu.matmul %51, %13, %cst_16 {dimension_numbers = #tpu.dot_dimension_numbers<[1], [0], [0], [1], [0, 0, 1, 1], [], []>} : vector<2x32xf32>, vector<32x128xf32>, vector<2x128xf32> -> vector<2x128xf32>
    %54 = arith.addf %52, %53 : vector<2x128xf32>
    %55 = arith.negf %54 : vector<2x128xf32>
    %56 = math.exp %55 : vector<2x128xf32>
    %cst_17 = arith.constant 1.000000e+00 : f32
    %57 = vector.broadcast %cst_17 : f32 to vector<2x128xf32>
    %58 = arith.addf %57, %56 : vector<2x128xf32>
    %59 = arith.divf %57, %58 : vector<2x128xf32>
    %60 = math.tanh %54 : vector<2x128xf32>
    %61 = vector.extract_strided_slice %59 {offsets = [0, 0], sizes = [2, 32], strides = [1, 1]} : vector<2x128xf32> to vector<2x32xf32>
    %62 = vector.extract_strided_slice %59 {offsets = [0, 32], sizes = [2, 32], strides = [1, 1]} : vector<2x128xf32> to vector<2x32xf32>
    %63 = vector.extract_strided_slice %60 {offsets = [0, 64], sizes = [2, 32], strides = [1, 1]} : vector<2x128xf32> to vector<2x32xf32>
    %64 = vector.extract_strided_slice %59 {offsets = [0, 96], sizes = [2, 32], strides = [1, 1]} : vector<2x128xf32> to vector<2x32xf32>
    %65 = arith.mulf %62, %49 : vector<2x32xf32>
    %66 = arith.mulf %61, %63 : vector<2x32xf32>
    %67 = arith.addf %65, %66 : vector<2x32xf32>
    %68 = math.tanh %67 : vector<2x32xf32>
    %69 = arith.mulf %64, %68 : vector<2x32xf32>
    %70 = vector.extract_strided_slice %12 {offsets = [6, 0], sizes = [2, 128], strides = [1, 1]} : vector<16x128xf32> to vector<2x128xf32>
    %cst_18 = arith.constant dense<0.000000e+00> : vector<2x128xf32>
    %71 = tpu.matmul %69, %13, %cst_18 {dimension_numbers = #tpu.dot_dimension_numbers<[1], [0], [0], [1], [0, 0, 1, 1], [], []>} : vector<2x32xf32>, vector<32x128xf32>, vector<2x128xf32> -> vector<2x128xf32>
    %72 = arith.addf %70, %71 : vector<2x128xf32>
    %73 = arith.negf %72 : vector<2x128xf32>
    %74 = math.exp %73 : vector<2x128xf32>
    %cst_19 = arith.constant 1.000000e+00 : f32
    %75 = vector.broadcast %cst_19 : f32 to vector<2x128xf32>
    %76 = arith.addf %75, %74 : vector<2x128xf32>
    %77 = arith.divf %75, %76 : vector<2x128xf32>
    %78 = math.tanh %72 : vector<2x128xf32>
    %79 = vector.extract_strided_slice %77 {offsets = [0, 0], sizes = [2, 32], strides = [1, 1]} : vector<2x128xf32> to vector<2x32xf32>
    %80 = vector.extract_strided_slice %77 {offsets = [0, 32], sizes = [2, 32], strides = [1, 1]} : vector<2x128xf32> to vector<2x32xf32>
    %81 = vector.extract_strided_slice %78 {offsets = [0, 64], sizes = [2, 32], strides = [1, 1]} : vector<2x128xf32> to vector<2x32xf32>
    %82 = vector.extract_strided_slice %77 {offsets = [0, 96], sizes = [2, 32], strides = [1, 1]} : vector<2x128xf32> to vector<2x32xf32>
    %83 = arith.mulf %80, %67 : vector<2x32xf32>
    %84 = arith.mulf %79, %81 : vector<2x32xf32>
    %85 = arith.addf %83, %84 : vector<2x32xf32>
    %86 = math.tanh %85 : vector<2x32xf32>
    %87 = arith.mulf %82, %86 : vector<2x32xf32>
    %88 = vector.extract_strided_slice %12 {offsets = [8, 0], sizes = [2, 128], strides = [1, 1]} : vector<16x128xf32> to vector<2x128xf32>
    %cst_20 = arith.constant dense<0.000000e+00> : vector<2x128xf32>
    %89 = tpu.matmul %87, %13, %cst_20 {dimension_numbers = #tpu.dot_dimension_numbers<[1], [0], [0], [1], [0, 0, 1, 1], [], []>} : vector<2x32xf32>, vector<32x128xf32>, vector<2x128xf32> -> vector<2x128xf32>
    %90 = arith.addf %88, %89 : vector<2x128xf32>
    %91 = arith.negf %90 : vector<2x128xf32>
    %92 = math.exp %91 : vector<2x128xf32>
    %cst_21 = arith.constant 1.000000e+00 : f32
    %93 = vector.broadcast %cst_21 : f32 to vector<2x128xf32>
    %94 = arith.addf %93, %92 : vector<2x128xf32>
    %95 = arith.divf %93, %94 : vector<2x128xf32>
    %96 = math.tanh %90 : vector<2x128xf32>
    %97 = vector.extract_strided_slice %95 {offsets = [0, 0], sizes = [2, 32], strides = [1, 1]} : vector<2x128xf32> to vector<2x32xf32>
    %98 = vector.extract_strided_slice %95 {offsets = [0, 32], sizes = [2, 32], strides = [1, 1]} : vector<2x128xf32> to vector<2x32xf32>
    %99 = vector.extract_strided_slice %96 {offsets = [0, 64], sizes = [2, 32], strides = [1, 1]} : vector<2x128xf32> to vector<2x32xf32>
    %100 = vector.extract_strided_slice %95 {offsets = [0, 96], sizes = [2, 32], strides = [1, 1]} : vector<2x128xf32> to vector<2x32xf32>
    %101 = arith.mulf %98, %85 : vector<2x32xf32>
    %102 = arith.mulf %97, %99 : vector<2x32xf32>
    %103 = arith.addf %101, %102 : vector<2x32xf32>
    %104 = math.tanh %103 : vector<2x32xf32>
    %105 = arith.mulf %100, %104 : vector<2x32xf32>
    %106 = vector.extract_strided_slice %12 {offsets = [10, 0], sizes = [2, 128], strides = [1, 1]} : vector<16x128xf32> to vector<2x128xf32>
    %cst_22 = arith.constant dense<0.000000e+00> : vector<2x128xf32>
    %107 = tpu.matmul %105, %13, %cst_22 {dimension_numbers = #tpu.dot_dimension_numbers<[1], [0], [0], [1], [0, 0, 1, 1], [], []>} : vector<2x32xf32>, vector<32x128xf32>, vector<2x128xf32> -> vector<2x128xf32>
    %108 = arith.addf %106, %107 : vector<2x128xf32>
    %109 = arith.negf %108 : vector<2x128xf32>
    %110 = math.exp %109 : vector<2x128xf32>
    %cst_23 = arith.constant 1.000000e+00 : f32
    %111 = vector.broadcast %cst_23 : f32 to vector<2x128xf32>
    %112 = arith.addf %111, %110 : vector<2x128xf32>
    %113 = arith.divf %111, %112 : vector<2x128xf32>
    %114 = math.tanh %108 : vector<2x128xf32>
    %115 = vector.extract_strided_slice %113 {offsets = [0, 0], sizes = [2, 32], strides = [1, 1]} : vector<2x128xf32> to vector<2x32xf32>
    %116 = vector.extract_strided_slice %113 {offsets = [0, 32], sizes = [2, 32], strides = [1, 1]} : vector<2x128xf32> to vector<2x32xf32>
    %117 = vector.extract_strided_slice %114 {offsets = [0, 64], sizes = [2, 32], strides = [1, 1]} : vector<2x128xf32> to vector<2x32xf32>
    %118 = vector.extract_strided_slice %113 {offsets = [0, 96], sizes = [2, 32], strides = [1, 1]} : vector<2x128xf32> to vector<2x32xf32>
    %119 = arith.mulf %116, %103 : vector<2x32xf32>
    %120 = arith.mulf %115, %117 : vector<2x32xf32>
    %121 = arith.addf %119, %120 : vector<2x32xf32>
    %122 = math.tanh %121 : vector<2x32xf32>
    %123 = arith.mulf %118, %122 : vector<2x32xf32>
    %124 = vector.extract_strided_slice %12 {offsets = [12, 0], sizes = [2, 128], strides = [1, 1]} : vector<16x128xf32> to vector<2x128xf32>
    %cst_24 = arith.constant dense<0.000000e+00> : vector<2x128xf32>
    %125 = tpu.matmul %123, %13, %cst_24 {dimension_numbers = #tpu.dot_dimension_numbers<[1], [0], [0], [1], [0, 0, 1, 1], [], []>} : vector<2x32xf32>, vector<32x128xf32>, vector<2x128xf32> -> vector<2x128xf32>
    %126 = arith.addf %124, %125 : vector<2x128xf32>
    %127 = arith.negf %126 : vector<2x128xf32>
    %128 = math.exp %127 : vector<2x128xf32>
    %cst_25 = arith.constant 1.000000e+00 : f32
    %129 = vector.broadcast %cst_25 : f32 to vector<2x128xf32>
    %130 = arith.addf %129, %128 : vector<2x128xf32>
    %131 = arith.divf %129, %130 : vector<2x128xf32>
    %132 = math.tanh %126 : vector<2x128xf32>
    %133 = vector.extract_strided_slice %131 {offsets = [0, 0], sizes = [2, 32], strides = [1, 1]} : vector<2x128xf32> to vector<2x32xf32>
    %134 = vector.extract_strided_slice %131 {offsets = [0, 32], sizes = [2, 32], strides = [1, 1]} : vector<2x128xf32> to vector<2x32xf32>
    %135 = vector.extract_strided_slice %132 {offsets = [0, 64], sizes = [2, 32], strides = [1, 1]} : vector<2x128xf32> to vector<2x32xf32>
    %136 = vector.extract_strided_slice %131 {offsets = [0, 96], sizes = [2, 32], strides = [1, 1]} : vector<2x128xf32> to vector<2x32xf32>
    %137 = arith.mulf %134, %121 : vector<2x32xf32>
    %138 = arith.mulf %133, %135 : vector<2x32xf32>
    %139 = arith.addf %137, %138 : vector<2x32xf32>
    %140 = math.tanh %139 : vector<2x32xf32>
    %141 = arith.mulf %136, %140 : vector<2x32xf32>
    %142 = vector.extract_strided_slice %12 {offsets = [14, 0], sizes = [2, 128], strides = [1, 1]} : vector<16x128xf32> to vector<2x128xf32>
    %cst_26 = arith.constant dense<0.000000e+00> : vector<2x128xf32>
    %143 = tpu.matmul %141, %13, %cst_26 {dimension_numbers = #tpu.dot_dimension_numbers<[1], [0], [0], [1], [0, 0, 1, 1], [], []>} : vector<2x32xf32>, vector<32x128xf32>, vector<2x128xf32> -> vector<2x128xf32>
    %144 = arith.addf %142, %143 : vector<2x128xf32>
    %145 = arith.negf %144 : vector<2x128xf32>
    %146 = math.exp %145 : vector<2x128xf32>
    %cst_27 = arith.constant 1.000000e+00 : f32
    %147 = vector.broadcast %cst_27 : f32 to vector<2x128xf32>
    %148 = arith.addf %147, %146 : vector<2x128xf32>
    %149 = arith.divf %147, %148 : vector<2x128xf32>
    %150 = math.tanh %144 : vector<2x128xf32>
    %151 = vector.extract_strided_slice %149 {offsets = [0, 0], sizes = [2, 32], strides = [1, 1]} : vector<2x128xf32> to vector<2x32xf32>
    %152 = vector.extract_strided_slice %149 {offsets = [0, 32], sizes = [2, 32], strides = [1, 1]} : vector<2x128xf32> to vector<2x32xf32>
    %153 = vector.extract_strided_slice %150 {offsets = [0, 64], sizes = [2, 32], strides = [1, 1]} : vector<2x128xf32> to vector<2x32xf32>
    %154 = vector.extract_strided_slice %149 {offsets = [0, 96], sizes = [2, 32], strides = [1, 1]} : vector<2x128xf32> to vector<2x32xf32>
    %155 = arith.mulf %152, %139 : vector<2x32xf32>
    %156 = arith.mulf %151, %153 : vector<2x32xf32>
    %157 = arith.addf %155, %156 : vector<2x32xf32>
    %158 = math.tanh %157 : vector<2x32xf32>
    %159 = arith.mulf %154, %158 : vector<2x32xf32>
    %cst_28 = arith.constant dense<0.000000e+00> : vector<2xf32>
    %160 = vector.multi_reduction <add>, %159, %cst_28 [1] : vector<2x32xf32> to vector<2xf32>
    %161 = vector.shape_cast %160 : vector<2xf32> to vector<2x1xf32>
    %cst_29 = arith.constant 3.200000e+01 : f32
    %162 = vector.broadcast %cst_29 : f32 to vector<2x1xf32>
    %163 = arith.divf %161, %162 : vector<2x1xf32>
    %164 = vector.broadcast %163 : vector<2x1xf32> to vector<2x32xf32>
    %165 = arith.subf %159, %164 : vector<2x32xf32>
    %166 = arith.mulf %165, %165 : vector<2x32xf32>
    %cst_30 = arith.constant dense<0.000000e+00> : vector<2xf32>
    %167 = vector.multi_reduction <add>, %166, %cst_30 [1] : vector<2x32xf32> to vector<2xf32>
    %168 = vector.shape_cast %167 : vector<2xf32> to vector<2x1xf32>
    %cst_31 = arith.constant 3.200000e+01 : f32
    %169 = vector.broadcast %cst_31 : f32 to vector<2x1xf32>
    %170 = arith.divf %168, %169 : vector<2x1xf32>
    %171 = vector.broadcast %163 : vector<2x1xf32> to vector<2x32xf32>
    %172 = arith.subf %159, %171 : vector<2x32xf32>
    %cst_32 = arith.constant 9.99999974E-6 : f32
    %173 = vector.broadcast %cst_32 : f32 to vector<2x1xf32>
    %174 = arith.addf %170, %173 : vector<2x1xf32>
    %175 = math.rsqrt %174 : vector<2x1xf32>
    %176 = vector.broadcast %175 : vector<2x1xf32> to vector<2x32xf32>
    %177 = arith.mulf %172, %176 : vector<2x32xf32>
    %c0_33 = arith.constant 0 : index
    %c0_34 = arith.constant 0 : index
    %178 = vector.load %arg6[%c0_33, %c0_34] : memref<1x32xf32, #tpu.memory_space<vmem>>, vector<1x32xf32>
    %179 = vector.broadcast %178 : vector<1x32xf32> to vector<2x32xf32>
    %180 = arith.mulf %177, %179 : vector<2x32xf32>
    %c0_35 = arith.constant 0 : index
    %c0_36 = arith.constant 0 : index
    %181 = vector.load %arg7[%c0_35, %c0_36] : memref<1x32xf32, #tpu.memory_space<vmem>>, vector<1x32xf32>
    %182 = vector.broadcast %181 : vector<1x32xf32> to vector<2x32xf32>
    %183 = arith.addf %180, %182 : vector<2x32xf32>
    %c0_37 = arith.constant 0 : index
    %c0_38 = arith.constant 0 : index
    %184 = vector.load %arg8[%c0_37, %c0_38] : memref<32x32xf32, #tpu.memory_space<vmem>>, vector<32x32xf32>
    %cst_39 = arith.constant dense<0.000000e+00> : vector<2x32xf32>
    %185 = tpu.matmul %183, %184, %cst_39 {dimension_numbers = #tpu.dot_dimension_numbers<[1], [0], [0], [1], [0, 0, 1, 1], [], []>} : vector<2x32xf32>, vector<32x32xf32>, vector<2x32xf32> -> vector<2x32xf32>
    %c0_40 = arith.constant 0 : index
    %c0_41 = arith.constant 0 : index
    %186 = vector.load %arg9[%c0_40, %c0_41] : memref<1x32xf32, #tpu.memory_space<vmem>>, vector<1x32xf32>
    %187 = vector.broadcast %186 : vector<1x32xf32> to vector<2x32xf32>
    %188 = arith.addf %185, %187 : vector<2x32xf32>
    %cst_42 = arith.constant 0.000000e+00 : f32
    %189 = vector.broadcast %cst_42 : f32 to vector<2x32xf32>
    %190 = arith.maximumf %188, %189 : vector<2x32xf32>
    %c0_43 = arith.constant 0 : index
    %c0_44 = arith.constant 0 : index
    %191 = vector.load %arg10[%c0_43, %c0_44] : memref<32x10xf32, #tpu.memory_space<vmem>>, vector<32x10xf32>
    %cst_45 = arith.constant dense<0.000000e+00> : vector<2x10xf32>
    %192 = tpu.matmul %190, %191, %cst_45 {dimension_numbers = #tpu.dot_dimension_numbers<[1], [0], [0], [1], [0, 0, 1, 1], [], []>} : vector<2x32xf32>, vector<32x10xf32>, vector<2x10xf32> -> vector<2x10xf32>
    %c0_46 = arith.constant 0 : index
    %c0_47 = arith.constant 0 : index
    %193 = vector.load %arg11[%c0_46, %c0_47] : memref<1x10xf32, #tpu.memory_space<vmem>>, vector<1x10xf32>
    %194 = vector.broadcast %193 : vector<1x10xf32> to vector<2x10xf32>
    %195 = arith.addf %192, %194 : vector<2x10xf32>
    %c0_48 = arith.constant 0 : index
    %c0_49 = arith.constant 0 : index
    %196 = vector.load %arg12[%c0_48, %c0_49] : memref<2x10xf32, #tpu.memory_space<vmem>>, vector<2x10xf32>
    tpu.vector_store %arg12[%c0_48, %c0_49], %195 {strides = array<i32>} : memref<2x10xf32, #tpu.memory_space<vmem>>, vector<2x10xf32>,
    return
  }
  func.func @transform_0(%arg0: i32) -> (i32, i32) {
    %c0_i32 = arith.constant 0 : i32
    %c0_i32_0 = arith.constant 0 : i32
    %c0_i32_1 = arith.constant 0 : i32
    return %c0_i32, %c0_i32_0 : i32, i32
  }
  func.func @transform_1(%arg0: i32) -> (i32, i32) {
    %c0_i32 = arith.constant 0 : i32
    %c0_i32_0 = arith.constant 0 : i32
    %c0_i32_1 = arith.constant 0 : i32
    return %c0_i32, %c0_i32_0 : i32, i32
  }
  func.func @transform_2(%arg0: i32) -> (i32, i32) {
    %c0_i32 = arith.constant 0 : i32
    %c0_i32_0 = arith.constant 0 : i32
    %c0_i32_1 = arith.constant 0 : i32
    return %c0_i32, %c0_i32_0 : i32, i32
  }
  func.func @transform_3(%arg0: i32) -> (i32, i32) {
    %c0_i32 = arith.constant 0 : i32
    %c0_i32_0 = arith.constant 0 : i32
    %c0_i32_1 = arith.constant 0 : i32
    return %c0_i32, %c0_i32_0 : i32, i32
  }
  func.func @transform_4(%arg0: i32) -> (i32, i32) {
    %c0_i32 = arith.constant 0 : i32
    %c0_i32_0 = arith.constant 0 : i32
    %c0_i32_1 = arith.constant 0 : i32
    return %c0_i32, %c0_i32_0 : i32, i32
  }
  func.func @transform_5(%arg0: i32) -> (i32, i32) {
    %c0_i32 = arith.constant 0 : i32
    %c0_i32_0 = arith.constant 0 : i32
    %c0_i32_1 = arith.constant 0 : i32
    return %c0_i32, %c0_i32_0 : i32, i32
  }
  func.func @transform_6(%arg0: i32) -> (i32, i32) {
    %c0_i32 = arith.constant 0 : i32
    %c0_i32_0 = arith.constant 0 : i32
    %c0_i32_1 = arith.constant 0 : i32
    return %c0_i32, %c0_i32_0 : i32, i32
  }
  func.func @transform_7(%arg0: i32) -> (i32, i32) {
    %c0_i32 = arith.constant 0 : i32
    %c0_i32_0 = arith.constant 0 : i32
    %c0_i32_1 = arith.constant 0 : i32
    return %c0_i32, %c0_i32_0 : i32, i32
  }
  func.func @transform_8(%arg0: i32) -> (i32, i32) {
    %c0_i32 = arith.constant 0 : i32
    %c0_i32_0 = arith.constant 0 : i32
    %c0_i32_1 = arith.constant 0 : i32
    return %c0_i32, %c0_i32_0 : i32, i32
  }
  func.func @transform_9(%arg0: i32) -> (i32, i32) {
    %c0_i32 = arith.constant 0 : i32
    %c0_i32_0 = arith.constant 0 : i32
    %c0_i32_1 = arith.constant 0 : i32
    return %c0_i32, %c0_i32_0 : i32, i32
  }
  func.func @transform_10(%arg0: i32) -> (i32, i32) {
    %c0_i32 = arith.constant 0 : i32
    %c0_i32_0 = arith.constant 0 : i32
    %c0_i32_1 = arith.constant 0 : i32
    return %c0_i32, %c0_i32_0 : i32, i32
  }
  func.func @transform_11(%arg0: i32) -> (i32, i32) {
    %c0_i32 = arith.constant 0 : i32
    %c0_i32_0 = arith.constant 0 : i32
    %c0_i32_1 = arith.constant 0 : i32
    return %c0_i32, %c0_i32_0 : i32, i32
  }
}

</mosaic_0001>

<llo_original>
// kernel: tpu_custom_call.1
$region0: #{tpu_custom_call.1}
  #allocation0 [shape = 'u32[]', space=smem, size = 0x4, offset = 0x4, fixed_abs, tag = 'smem constant byte address 0x4 - core index']
  #allocation1 [shape = 'u32[144,128]{1,0:T(1,128)}', space=vmem, size = 0x12000, scoped, tag = 'internal scratch']
  %s0 = inlined_call_operand.vmem [shape: s32[16,1], index: 0, kind: input, shape index: {}]
  %s1 = inlined_call_operand.vmem [shape: f32[50,32], index: 1, kind: input, shape index: {}]
  %s2 = inlined_call_operand.vmem [shape: f32[32,128], index: 2, kind: input, shape index: {}]
  %s3 = inlined_call_operand.vmem [shape: f32[32,128], index: 3, kind: input, shape index: {}]
  %s4 = inlined_call_operand.vmem [shape: f32[1,128], index: 4, kind: input, shape index: {}]
  %s5 = inlined_call_operand.vmem [shape: f32[1,32], index: 5, kind: input, shape index: {}]
  %s6 = inlined_call_operand.vmem [shape: f32[1,32], index: 6, kind: input, shape index: {}]
  %s7 = inlined_call_operand.vmem [shape: f32[32,32], index: 7, kind: input, shape index: {}]
  %s8 = inlined_call_operand.vmem [shape: f32[1,32], index: 8, kind: input, shape index: {}]
  %s9 = inlined_call_operand.vmem [shape: f32[32,10], index: 9, kind: input, shape index: {}]
  %s10 = inlined_call_operand.vmem [shape: f32[1,10], index: 10, kind: input, shape index: {}]
  %s11 = inlined_call_operand.hbm [shape: f32[2,10], index: 11, kind: output, shape index: {}]
  %s12 = sld [smem:[#allocation0]]
  $region54: #{tpu_custom_call.1} parent=0
    _
  %s14 = ssub.s32 1, %s12
  %s15 = scalar_select 0, %s14, %s12
  $region1: #{tpu_custom_call.1} parent=0
    #allocation2 [shape = 'u8[1024]{0}', space=vmem, size = 0x400, scoped, tag = 'output window, operand 0, single buffered']
    #allocation3 [shape = 's32[1]{0}', space=sflag, size = 0x4, scoped, tag = 'scoped memory for tpu_custom_call.1']
    %16 = vsyncpa [#allocation3], 0
    // Predicated region
    $region2: #{tpu_custom_call.1} parent=1 // pred_check
      _
    $region3: #{tpu_custom_call.1} parent=1 // pred_check_branch
      %18 = sbr.rel (0) target = $region5
    $region4: #{tpu_custom_call.1} parent=1 // pred_region
      _
    $region5: #{tpu_custom_call.1} parent=1 // pred_fallthru
      _
    // Predicated region
    $region6: #{tpu_custom_call.1} parent=1 // pred_check
      _
    $region7: #{tpu_custom_call.1} parent=1 // pred_check_branch
      %20 = sbr.rel (0) target = $region9
    $region8: #{tpu_custom_call.1} parent=1 // pred_region
      _
    $region9: #{tpu_custom_call.1} parent=1 // pred_fallthru
      _
    // Predicated region
    $region10: #{tpu_custom_call.1} parent=1 // pred_check
      _
    $region11: #{tpu_custom_call.1} parent=1 // pred_check_branch
      %22 = sbr.rel (0) target = $region13
    $region12: #{tpu_custom_call.1} parent=1 // pred_region
      _
    $region13: #{tpu_custom_call.1} parent=1 // pred_fallthru
      _
    // Predicated region
    $region14: #{tpu_custom_call.1} parent=1 // pred_check
      _
    $region15: #{tpu_custom_call.1} parent=1 // pred_check_branch
      %24 = sbr.rel (0) target = $region17
    $region16: #{tpu_custom_call.1} parent=1 // pred_region
      _
    $region17: #{tpu_custom_call.1} parent=1 // pred_fallthru
      _
    // Predicated region
    $region18: #{tpu_custom_call.1} parent=1 // pred_check
      _
    $region19: #{tpu_custom_call.1} parent=1 // pred_check_branch
      %26 = sbr.rel (0) target = $region21
    $region20: #{tpu_custom_call.1} parent=1 // pred_region
      _
    $region21: #{tpu_custom_call.1} parent=1 // pred_fallthru
      _
    // Predicated region
    $region22: #{tpu_custom_call.1} parent=1 // pred_check
      _
    $region23: #{tpu_custom_call.1} parent=1 // pred_check_branch
      %28 = sbr.rel (0) target = $region25
    $region24: #{tpu_custom_call.1} parent=1 // pred_region
      _
    $region25: #{tpu_custom_call.1} parent=1 // pred_fallthru
      _
    // Predicated region
    $region26: #{tpu_custom_call.1} parent=1 // pred_check
      _
    $region27: #{tpu_custom_call.1} parent=1 // pred_check_branch
      %30 = sbr.rel (0) target = $region29
    $region28: #{tpu_custom_call.1} parent=1 // pred_region
      _
    $region29: #{tpu_custom_call.1} parent=1 // pred_fallthru
      _
    // Predicated region
    $region30: #{tpu_custom_call.1} parent=1 // pred_check
      _
    $region31: #{tpu_custom_call.1} parent=1 // pred_check_branch
      %32 = sbr.rel (0) target = $region33
    $region32: #{tpu_custom_call.1} parent=1 // pred_region
      _
    $region33: #{tpu_custom_call.1} parent=1 // pred_fallthru
      _
    // Predicated region
    $region34: #{tpu_custom_call.1} parent=1 // pred_check
      _
    $region35: #{tpu_custom_call.1} parent=1 // pred_check_branch
      %34 = sbr.rel (0) target = $region37
    $region36: #{tpu_custom_call.1} parent=1 // pred_region
      _
    $region37: #{tpu_custom_call.1} parent=1 // pred_fallthru
      _
    // Predicated region
    $region38: #{tpu_custom_call.1} parent=1 // pred_check
      _
    $region39: #{tpu_custom_call.1} parent=1 // pred_check_branch
      %36 = sbr.rel (0) target = $region41
    $region40: #{tpu_custom_call.1} parent=1 // pred_region
      _
    $region41: #{tpu_custom_call.1} parent=1 // pred_fallthru
      _
    // Predicated region
    $region42: #{tpu_custom_call.1} parent=1 // pred_check
      _
    $region43: #{tpu_custom_call.1} parent=1 // pred_check_branch
      %38 = sbr.rel (0) target = $region45
    $region44: #{tpu_custom_call.1} parent=1 // pred_region
      _
    $region45: #{tpu_custom_call.1} parent=1 // pred_fallthru
      _
    %v39 = vld [vmem:[%s0] sm:$0xff]
    %v40 = vld [vmem:[%s0 + $0x8] sm:$0xff]
    %v41 = vlaneseq
    %v42 = vand.u32 %v41, 127
    %43 = vset.pattern.permute.xlu0 0
    %44 = vperm.xlu0 %43, %v39
    %v45 = vpop.permute.xlu0 %44
    %46 = vset.pattern.permute.xlu0 0
    %47 = vperm.xlu0 %46, %v40
    %v48 = vpop.permute.xlu0 %47
    %vm49 = vcmp.eq.s32.totalorder %v42, %v45
    %vm50 = vcmp.eq.s32.totalorder %v42, %v48
    %v51 = vsel %vm49, 1, 0
    %v52 = vsel %vm50, 1, 0
    %v53 = vcvt.s32.f32 %v51
    %v54 = vcvt.s32.f32 %v52
    %v55 = vld [vmem:[%s1] sm:$0xff]
    %v56 = vld [vmem:[%s1 + $0x8] sm:$0xff]
    %v57 = vld [vmem:[%s1 + $0x10] sm:$0xff]
    %v58 = vld [vmem:[%s1 + $0x18] sm:$0xff]
    %v59 = vld [vmem:[%s1 + $0x20] sm:$0xff]
    %v60 = vld [vmem:[%s1 + $0x28] sm:$0xff]
    %v61 = vld [vmem:[%s1 + $0x30] sm:$0x3]
    %vm62 = vcmask 408576
    %v64 = vsel %vm62, %v53, 0
    %v67 = vsel %vm62, %v54, 0
    %vm69 = vcmask 1041408
    %v71 = vsel %vm69, %v61, 0
    %73 = vmatprep.subr.mxu0 0.0
    %74 = vmatpush1.msra.mxu0 %v55
    %75 = vmatprep.subr.mxu0 0.0
    %76 = vmatpush1.msra.mxu0 %v56
    %77 = vmatprep.subr.mxu0 0.0
    %78 = vmatpush1.msra.mxu0 %v57
    %79 = vmatprep.subr.mxu0 0.0
    %80 = vmatpush1.msra.mxu0 %v58
    %81 = vmatprep.subr.mxu0 0.0
    %82 = vmatpush1.msra.mxu0 %v59
    %83 = vmatprep.subr.mxu0 0.0
    %84 = vmatpush1.msra.mxu0 %v60
    %85 = vmatprep.subr.mxu0 0.0
    %86 = vmatpush1.msra.mxu0 %v71
    %87 = vmatprep.subr.mxu0 0.0
    %88 = vmatpush1.msra.mxu0 0.0
    %89 = vmatprep.subr.mxu0 0.0
    %90 = vmatpush1.msra.mxu0 0.0
    %91 = vmatprep.subr.mxu0 0.0
    %92 = vmatpush1.msra.mxu0 0.0
    %93 = vmatprep.subr.mxu0 0.0
    %94 = vmatpush1.msra.mxu0 0.0
    %95 = vmatprep.subr.mxu0 0.0
    %96 = vmatpush1.msra.mxu0 0.0
    %97 = vmatprep.subr.mxu0 0.0
    %98 = vmatpush1.msra.mxu0 0.0
    %99 = vmatprep.subr.mxu0 0.0
    %100 = vmatpush1.msra.mxu0 0.0
    %101 = vmatprep.subr.mxu0 0.0
    %102 = vmatpush1.msra.mxu0 0.0
    %103 = vmatprep.subr.mxu0 0.0
    %104 = vmatpush1.msra.mxu0 0.0
    %105 = vmatprep.subr.mxu0 0.0
    %106 = vmatpush1.msra.mxu0 0.0
    %107 = vmatprep.subr.mxu0 0.0
    %108 = vmatpush1.msra.mxu0 0.0
    %109 = vmatprep.subr.mxu0 0.0
    %110 = vmatpush1.msra.mxu0 0.0
    %111 = vmatprep.subr.mxu0 0.0
    %112 = vmatpush1.msra.mxu0 0.0
    %113 = vmatprep.subr.mxu0 0.0
    %114 = vmatpush1.msra.mxu0 0.0
    %115 = vmatprep.subr.mxu0 0.0
    %116 = vmatpush1.msra.mxu0 0.0
    %117 = vmatprep.subr.mxu0 0.0
    %118 = vmatpush1.msra.mxu0 0.0
    %119 = vmatprep.subr.mxu0 0.0
    %120 = vmatpush1.msra.mxu0 0.0
    %121 = vmatprep.subr.mxu0 0.0
    %122 = vmatpush1.msra.mxu0 0.0
    %123 = vmatprep.subr.mxu0 0.0
    %124 = vmatpush1.msra.mxu0 0.0
    %125 = vmatprep.subr.mxu0 0.0
    %126 = vmatpush1.msra.mxu0 0.0
    %127 = vmatprep.subr.mxu0 0.0
    %128 = vmatpush1.msra.mxu0 0.0
    %129 = vmatprep.subr.mxu0 0.0
    %130 = vmatpush1.msra.mxu0 0.0
    %131 = vmatprep.subr.mxu0 0.0
    %132 = vmatpush1.msra.mxu0 0.0
    %133 = vmatprep.subr.mxu0 0.0
    %134 = vmatpush1.msra.mxu0 0.0
    %135 = vmatprep.subr.mxu0 0.0
    %136 = vmatpush1.msra.mxu0 0.0
    %137 = vmatprep.mubr.f32.mxu0 0.0
    %138 = vmatmul.mubr.f32.gmra.mrb[0].mxu0 %v64
    %v139 = vpop.f32.mrb[0].mxu0
    %v140 = vadd.f32 0.0, %v139
    %v141 = vpop.f32.mrb[0].mxu0
    %142 = vmatprep.mubr.f32.mxu0 0.0
    %143 = vmatmul.mubr.f32.gmra.mrb[0].mxu0 %v67
    %v144 = vpop.f32.mrb[0].mxu0
    %v145 = vadd.f32 0.0, %v144
    %v146 = vpop.f32.mrb[0].mxu0
    %147 = vdwg.mxu0
    %v148 = vld [vmem:[%s2] sm:$0xff]
    %v149 = vld [vmem:[%s2 + $0x8] sm:$0xff]
    %v150 = vld [vmem:[%s2 + $0x10] sm:$0xff]
    %v151 = vld [vmem:[%s2 + $0x18] sm:$0xff]
    %v152 = vld [vmem:[%s4] sm:$0x1]
    %v154 = vlaneseq
    %v155 = vshrl.u32 %v154, 7
    %v156 = vsub.s32 0, %v155
    %v157 = vrot.slane %v152, %v156
    %vm159 = vcmask 261120
    %v161 = vsel %vm159, %v140, 0
    %v164 = vsel %vm159, %v145, 0
    %166 = vmatprep.subr.mxu0 0.0
    %167 = vmatpush1.msra.mxu0 %v148
    %168 = vmatprep.subr.mxu0 0.0
    %169 = vmatpush1.msra.mxu0 %v149
    %170 = vmatprep.subr.mxu0 0.0
    %171 = vmatpush1.msra.mxu0 %v150
    %172 = vmatprep.subr.mxu0 0.0
    %173 = vmatpush1.msra.mxu0 %v151
    %174 = vmatprep.subr.mxu0 0.0
    %175 = vmatpush1.msra.mxu0 0.0
    %176 = vmatprep.subr.mxu0 0.0
    %177 = vmatpush1.msra.mxu0 0.0
    %178 = vmatprep.subr.mxu0 0.0
    %179 = vmatpush1.msra.mxu0 0.0
    %180 = vmatprep.subr.mxu0 0.0
    %181 = vmatpush1.msra.mxu0 0.0
    %182 = vmatprep.subr.mxu0 0.0
    %183 = vmatpush1.msra.mxu0 0.0
    %184 = vmatprep.subr.mxu0 0.0
    %185 = vmatpush1.msra.mxu0 0.0
    %186 = vmatprep.subr.mxu0 0.0
    %187 = vmatpush1.msra.mxu0 0.0
    %188 = vmatprep.subr.mxu0 0.0
    %189 = vmatpush1.msra.mxu0 0.0
    %190 = vmatprep.subr.mxu0 0.0
    %191 = vmatpush1.msra.mxu0 0.0
    %192 = vmatprep.subr.mxu0 0.0
    %193 = vmatpush1.msra.mxu0 0.0
    %194 = vmatprep.subr.mxu0 0.0
    %195 = vmatpush1.msra.mxu0 0.0
    %196 = vmatprep.subr.mxu0 0.0
    %197 = vmatpush1.msra.mxu0 0.0
    %198 = vmatprep.subr.mxu0 0.0
    %199 = vmatpush1.msra.mxu0 0.0
    %200 = vmatprep.subr.mxu0 0.0
    %201 = vmatpush1.msra.mxu0 0.0
    %202 = vmatprep.subr.mxu0 0.0
    %203 = vmatpush1.msra.mxu0 0.0
    %204 = vmatprep.subr.mxu0 0.0
    %205 = vmatpush1.msra.mxu0 0.0
    %206 = vmatprep.subr.mxu0 0.0
    %207 = vmatpush1.msra.mxu0 0.0
    %208 = vmatprep.subr.mxu0 0.0
    %209 = vmatpush1.msra.mxu0 0.0
    %210 = vmatprep.subr.mxu0 0.0
    %211 = vmatpush1.msra.mxu0 0.0
    %212 = vmatprep.subr.mxu0 0.0
    %213 = vmatpush1.msra.mxu0 0.0
    %214 = vmatprep.subr.mxu0 0.0
    %215 = vmatpush1.msra.mxu0 0.0
    %216 = vmatprep.subr.mxu0 0.0
    %217 = vmatpush1.msra.mxu0 0.0
    %218 = vmatprep.subr.mxu0 0.0
    %219 = vmatpush1.msra.mxu0 0.0
    %220 = vmatprep.subr.mxu0 0.0
    %221 = vmatpush1.msra.mxu0 0.0
    %222 = vmatprep.subr.mxu0 0.0
    %223 = vmatpush1.msra.mxu0 0.0
    %224 = vmatprep.subr.mxu0 0.0
    %225 = vmatpush1.msra.mxu0 0.0
    %226 = vmatprep.subr.mxu0 0.0
    %227 = vmatpush1.msra.mxu0 0.0
    %228 = vmatprep.subr.mxu0 0.0
    %229 = vmatpush1.msra.mxu0 0.0
    %230 = vmatprep.mubr.f32.mxu0 0.0
    %231 = vmatmul.mubr.f32.gmra.mrb[0].mxu0 %v161
    %v232 = vpop.f32.mrb[0].mxu0
    %v233 = vadd.f32 %v157, %v232
    %v234 = vpop.f32.mrb[0].mxu0
    %235 = vmatprep.mubr.f32.mxu0 0.0
    %236 = vmatmul.mubr.f32.gmra.mrb[0].mxu0 %v164
    %v237 = vpop.f32.mrb[0].mxu0
    %v238 = vadd.f32 %v157, %v237
    %v239 = vpop.f32.mrb[0].mxu0
    %240 = vdwg.mxu0
    %v241 = vld [vmem:[%s3] sm:$0xff]
    %v242 = vld [vmem:[%s3 + $0x8] sm:$0xff]
    %v243 = vld [vmem:[%s3 + $0x10] sm:$0xff]
    %v244 = vld [vmem:[%s3 + $0x18] sm:$0xff]
    %v246 = vsel %vm159, 0.0, 0
    %248 = vmatprep.subr.mxu0 0.0
    %249 = vmatpush1.msra.mxu0 %v241
    %250 = vmatprep.subr.mxu0 0.0
    %251 = vmatpush1.msra.mxu0 %v242
    %252 = vmatprep.subr.mxu0 0.0
    %253 = vmatpush1.msra.mxu0 %v243
    %254 = vmatprep.subr.mxu0 0.0
    %255 = vmatpush1.msra.mxu0 %v244
    %256 = vmatprep.subr.mxu0 0.0
    %257 = vmatpush1.msra.mxu0 0.0
    %258 = vmatprep.subr.mxu0 0.0
    %259 = vmatpush1.msra.mxu0 0.0
    %260 = vmatprep.subr.mxu0 0.0
    %261 = vmatpush1.msra.mxu0 0.0
    %262 = vmatprep.subr.mxu0 0.0
    %263 = vmatpush1.msra.mxu0 0.0
    %264 = vmatprep.subr.mxu0 0.0
    %265 = vmatpush1.msra.mxu0 0.0
    %266 = vmatprep.subr.mxu0 0.0
    %267 = vmatpush1.msra.mxu0 0.0
    %268 = vmatprep.subr.mxu0 0.0
    %269 = vmatpush1.msra.mxu0 0.0
    %270 = vmatprep.subr.mxu0 0.0
    %271 = vmatpush1.msra.mxu0 0.0
    %272 = vmatprep.subr.mxu0 0.0
    %273 = vmatpush1.msra.mxu0 0.0
    %274 = vmatprep.subr.mxu0 0.0
    %275 = vmatpush1.msra.mxu0 0.0
    %276 = vmatprep.subr.mxu0 0.0
    %277 = vmatpush1.msra.mxu0 0.0
    %278 = vmatprep.subr.mxu0 0.0
    %279 = vmatpush1.msra.mxu0 0.0
    %280 = vmatprep.subr.mxu0 0.0
    %281 = vmatpush1.msra.mxu0 0.0
    %282 = vmatprep.subr.mxu0 0.0
    %283 = vmatpush1.msra.mxu0 0.0
    %284 = vmatprep.subr.mxu0 0.0
    %285 = vmatpush1.msra.mxu0 0.0
    %286 = vmatprep.subr.mxu0 0.0
    %287 = vmatpush1.msra.mxu0 0.0
    %288 = vmatprep.subr.mxu0 0.0
    %289 = vmatpush1.msra.mxu0 0.0
    %290 = vmatprep.subr.mxu0 0.0
    %291 = vmatpush1.msra.mxu0 0.0
    %292 = vmatprep.subr.mxu0 0.0
    %293 = vmatpush1.msra.mxu0 0.0
    %294 = vmatprep.subr.mxu0 0.0
    %295 = vmatpush1.msra.mxu0 0.0
    %296 = vmatprep.subr.mxu0 0.0
    %297 = vmatpush1.msra.mxu0 0.0
    %298 = vmatprep.subr.mxu0 0.0
    %299 = vmatpush1.msra.mxu0 0.0
    %300 = vmatprep.subr.mxu0 0.0
    %301 = vmatpush1.msra.mxu0 0.0
    %302 = vmatprep.subr.mxu0 0.0
    %303 = vmatpush1.msra.mxu0 0.0
    %304 = vmatprep.subr.mxu0 0.0
    %305 = vmatpush1.msra.mxu0 0.0
    %306 = vmatprep.subr.mxu0 0.0
    %307 = vmatpush1.msra.mxu0 0.0
    %308 = vmatprep.subr.mxu0 0.0
    %309 = vmatpush1.msra.mxu0 0.0
    %310 = vmatprep.subr.mxu0 0.0
    %311 = vmatpush1.msra.mxu0 0.0
    %312 = vmatprep.mubr.f32.mxu0 0.0
    %313 = vmatmul.mubr.f32.gmra.mrb[0].mxu0 %v246
    %v314 = vpop.f32.mrb[0].mxu0
    %v315 = vadd.f32 0.0, %v314
    %v316 = vpop.f32.mrb[0].mxu0
    %317 = vdwg.mxu0
    %v318 = vadd.f32 %v233, %v315
    %v319 = vxor.u32 %v318, 2147483648
    %v320 = vmul.f32 %v319, 1.442695
    %v321 = vpow.pop %v320
    %v322 = vadd.f32 %v321, 1.0
    %v323 = vrcp.pop %v322
    %v324 = vmul.f32 1.0, %v323
    %v325 = vtanh.pop %v318
    %v326 = vmul.f32 %v324, 0.0
    %328 = vrot.lane.b32.xlu0 %v325, 64
    %v329 = vpop.permute.xlu0 %328
    %v331 = vmul.f32 %v324, %v329
    %333 = vrot.lane.b32.xlu0 %v331, 32
    %v334 = vpop.permute.xlu0 %333
    %v336 = vadd.f32 %v326, %v334
    %v337 = vtanh.pop %v336
    %339 = vrot.lane.b32.xlu0 %v337, 64
    %v340 = vpop.permute.xlu0 %339
    %v342 = vmul.f32 %v324, %v340
    %344 = vrot.lane.b32.xlu0 %v342, 32
    %v345 = vpop.permute.xlu0 %344
    %v346 = vsel %vm159, %v345, 0
    %348 = vmatprep.subr.mxu0 0.0
    %349 = vmatpush1.msra.mxu0 %v241
    %350 = vmatprep.subr.mxu0 0.0
    %351 = vmatpush1.msra.mxu0 %v242
    %352 = vmatprep.subr.mxu0 0.0
    %353 = vmatpush1.msra.mxu0 %v243
    %354 = vmatprep.subr.mxu0 0.0
    %355 = vmatpush1.msra.mxu0 %v244
    %356 = vmatprep.subr.mxu0 0.0
    %357 = vmatpush1.msra.mxu0 0.0
    %358 = vmatprep.subr.mxu0 0.0
    %359 = vmatpush1.msra.mxu0 0.0
    %360 = vmatprep.subr.mxu0 0.0
    %361 = vmatpush1.msra.mxu0 0.0
    %362 = vmatprep.subr.mxu0 0.0
    %363 = vmatpush1.msra.mxu0 0.0
    %364 = vmatprep.subr.mxu0 0.0
    %365 = vmatpush1.msra.mxu0 0.0
    %366 = vmatprep.subr.mxu0 0.0
    %367 = vmatpush1.msra.mxu0 0.0
    %368 = vmatprep.subr.mxu0 0.0
    %369 = vmatpush1.msra.mxu0 0.0
    %370 = vmatprep.subr.mxu0 0.0
    %371 = vmatpush1.msra.mxu0 0.0
    %372 = vmatprep.subr.mxu0 0.0
    %373 = vmatpush1.msra.mxu0 0.0
    %374 = vmatprep.subr.mxu0 0.0
    %375 = vmatpush1.msra.mxu0 0.0
    %376 = vmatprep.subr.mxu0 0.0
    %377 = vmatpush1.msra.mxu0 0.0
    %378 = vmatprep.subr.mxu0 0.0
    %379 = vmatpush1.msra.mxu0 0.0
    %380 = vmatprep.subr.mxu0 0.0
    %381 = vmatpush1.msra.mxu0 0.0
    %382 = vmatprep.subr.mxu0 0.0
    %383 = vmatpush1.msra.mxu0 0.0
    %384 = vmatprep.subr.mxu0 0.0
    %385 = vmatpush1.msra.mxu0 0.0
    %386 = vmatprep.subr.mxu0 0.0
    %387 = vmatpush1.msra.mxu0 0.0
    %388 = vmatprep.subr.mxu0 0.0
    %389 = vmatpush1.msra.mxu0 0.0
    %390 = vmatprep.subr.mxu0 0.0
    %391 = vmatpush1.msra.mxu0 0.0
    %392 = vmatprep.subr.mxu0 0.0
    %393 = vmatpush1.msra.mxu0 0.0
    %394 = vmatprep.subr.mxu0 0.0
    %395 = vmatpush1.msra.mxu0 0.0
    %396 = vmatprep.subr.mxu0 0.0
    %397 = vmatpush1.msra.mxu0 0.0
    %398 = vmatprep.subr.mxu0 0.0
    %399 = vmatpush1.msra.mxu0 0.0
    %400 = vmatprep.subr.mxu0 0.0
    %401 = vmatpush1.msra.mxu0 0.0
    %402 = vmatprep.subr.mxu0 0.0
    %403 = vmatpush1.msra.mxu0 0.0
    %404 = vmatprep.subr.mxu0 0.0
    %405 = vmatpush1.msra.mxu0 0.0
    %406 = vmatprep.subr.mxu0 0.0
    %407 = vmatpush1.msra.mxu0 0.0
    %408 = vmatprep.subr.mxu0 0.0
    %409 = vmatpush1.msra.mxu0 0.0
    %410 = vmatprep.subr.mxu0 0.0
    %411 = vmatpush1.msra.mxu0 0.0
    %412 = vmatprep.mubr.f32.mxu0 0.0
    %413 = vmatmul.mubr.f32.gmra.mrb[0].mxu0 %v346
    %v414 = vpop.f32.mrb[0].mxu0
    %v415 = vadd.f32 0.0, %v414
    %v416 = vpop.f32.mrb[0].mxu0
    %417 = vdwg.mxu0
    %v419 = vrot.slane %v415, 6
    %v421 = vadd.f32 %v233, %v419
    %v422 = vxor.u32 %v421, 2147483648
    %v423 = vmul.f32 %v422, 1.442695
    %v424 = vpow.pop %v423
    %v425 = vadd.f32 %v424, 1.0
    %v426 = vrcp.pop %v425
    %v427 = vmul.f32 1.0, %v426
    %v428 = vtanh.pop %v421
    %v430 = vrot.slane %v336, 6
    %v432 = vmul.f32 %v427, %v430
    %434 = vrot.lane.b32.xlu0 %v428, 64
    %v435 = vpop.permute.xlu0 %434
    %v437 = vmul.f32 %v427, %v435
    %439 = vrot.lane.b32.xlu0 %v437, 32
    %v440 = vpop.permute.xlu0 %439
    %v442 = vadd.f32 %v432, %v440
    %v443 = vtanh.pop %v442
    %445 = vrot.lane.b32.xlu0 %v443, 64
    %v446 = vpop.permute.xlu0 %445
    %v448 = vmul.f32 %v427, %v446
    %v450 = vrot.slane %v448, 2
    %451 = vrot.lane.b32.xlu0 %v450, 32
    %v452 = vpop.permute.xlu0 %451
    %v453 = vsel %vm159, %v452, 0
    %455 = vmatprep.subr.mxu0 0.0
    %456 = vmatpush1.msra.mxu0 %v241
    %457 = vmatprep.subr.mxu0 0.0
    %458 = vmatpush1.msra.mxu0 %v242
    %459 = vmatprep.subr.mxu0 0.0
    %460 = vmatpush1.msra.mxu0 %v243
    %461 = vmatprep.subr.mxu0 0.0
    %462 = vmatpush1.msra.mxu0 %v244
    %463 = vmatprep.subr.mxu0 0.0
    %464 = vmatpush1.msra.mxu0 0.0
    %465 = vmatprep.subr.mxu0 0.0
    %466 = vmatpush1.msra.mxu0 0.0
    %467 = vmatprep.subr.mxu0 0.0
    %468 = vmatpush1.msra.mxu0 0.0
    %469 = vmatprep.subr.mxu0 0.0
    %470 = vmatpush1.msra.mxu0 0.0
    %471 = vmatprep.subr.mxu0 0.0
    %472 = vmatpush1.msra.mxu0 0.0
    %473 = vmatprep.subr.mxu0 0.0
    %474 = vmatpush1.msra.mxu0 0.0
    %475 = vmatprep.subr.mxu0 0.0
    %476 = vmatpush1.msra.mxu0 0.0
    %477 = vmatprep.subr.mxu0 0.0
    %478 = vmatpush1.msra.mxu0 0.0
    %479 = vmatprep.subr.mxu0 0.0
    %480 = vmatpush1.msra.mxu0 0.0
    %481 = vmatprep.subr.mxu0 0.0
    %482 = vmatpush1.msra.mxu0 0.0
    %483 = vmatprep.subr.mxu0 0.0
    %484 = vmatpush1.msra.mxu0 0.0
    %485 = vmatprep.subr.mxu0 0.0
    %486 = vmatpush1.msra.mxu0 0.0
    %487 = vmatprep.subr.mxu0 0.0
    %488 = vmatpush1.msra.mxu0 0.0
    %489 = vmatprep.subr.mxu0 0.0
    %490 = vmatpush1.msra.mxu0 0.0
    %491 = vmatprep.subr.mxu0 0.0
    %492 = vmatpush1.msra.mxu0 0.0
    %493 = vmatprep.subr.mxu0 0.0
    %494 = vmatpush1.msra.mxu0 0.0
    %495 = vmatprep.subr.mxu0 0.0
    %496 = vmatpush1.msra.mxu0 0.0
    %497 = vmatprep.subr.mxu0 0.0
    %498 = vmatpush1.msra.mxu0 0.0
    %499 = vmatprep.subr.mxu0 0.0
    %500 = vmatpush1.msra.mxu0 0.0
    %501 = vmatprep.subr.mxu0 0.0
    %502 = vmatpush1.msra.mxu0 0.0
    %503 = vmatprep.subr.mxu0 0.0
    %504 = vmatpush1.msra.mxu0 0.0
    %505 = vmatprep.subr.mxu0 0.0
    %506 = vmatpush1.msra.mxu0 0.0
    %507 = vmatprep.subr.mxu0 0.0
    %508 = vmatpush1.msra.mxu0 0.0
    %509 = vmatprep.subr.mxu0 0.0
    %510 = vmatpush1.msra.mxu0 0.0
    %511 = vmatprep.subr.mxu0 0.0
    %512 = vmatpush1.msra.mxu0 0.0
    %513 = vmatprep.subr.mxu0 0.0
    %514 = vmatpush1.msra.mxu0 0.0
    %515 = vmatprep.subr.mxu0 0.0
    %516 = vmatpush1.msra.mxu0 0.0
    %517 = vmatprep.subr.mxu0 0.0
    %518 = vmatpush1.msra.mxu0 0.0
    %519 = vmatprep.mubr.f32.mxu0 0.0
    %520 = vmatmul.mubr.f32.gmra.mrb[0].mxu0 %v453
    %v521 = vpop.f32.mrb[0].mxu0
    %v522 = vadd.f32 0.0, %v521
    %v523 = vpop.f32.mrb[0].mxu0
    %524 = vdwg.mxu0
    %v526 = vrot.slane %v522, 4
    %v528 = vadd.f32 %v233, %v526
    %v529 = vxor.u32 %v528, 2147483648
    %v530 = vmul.f32 %v529, 1.442695
    %v531 = vpow.pop %v530
    %v532 = vadd.f32 %v531, 1.0
    %v533 = vrcp.pop %v532
    %v534 = vmul.f32 1.0, %v533
    %v535 = vtanh.pop %v528
    %v537 = vrot.slane %v442, 6
    %v539 = vmul.f32 %v534, %v537
    %541 = vrot.lane.b32.xlu0 %v535, 64
    %v542 = vpop.permute.xlu0 %541
    %v544 = vmul.f32 %v534, %v542
    %546 = vrot.lane.b32.xlu0 %v544, 32
    %v547 = vpop.permute.xlu0 %546
    %v549 = vadd.f32 %v539, %v547
    %v550 = vtanh.pop %v549
    %552 = vrot.lane.b32.xlu0 %v550, 64
    %v553 = vpop.permute.xlu0 %552
    %v555 = vmul.f32 %v534, %v553
    %v557 = vrot.slane %v555, 4
    %558 = vrot.lane.b32.xlu0 %v557, 32
    %v559 = vpop.permute.xlu0 %558
    %v560 = vsel %vm159, %v559, 0
    %562 = vmatprep.subr.mxu0 0.0
    %563 = vmatpush1.msra.mxu0 %v241
    %564 = vmatprep.subr.mxu0 0.0
    %565 = vmatpush1.msra.mxu0 %v242
    %566 = vmatprep.subr.mxu0 0.0
    %567 = vmatpush1.msra.mxu0 %v243
    %568 = vmatprep.subr.mxu0 0.0
    %569 = vmatpush1.msra.mxu0 %v244
    %570 = vmatprep.subr.mxu0 0.0
    %571 = vmatpush1.msra.mxu0 0.0
    %572 = vmatprep.subr.mxu0 0.0
    %573 = vmatpush1.msra.mxu0 0.0
    %574 = vmatprep.subr.mxu0 0.0
    %575 = vmatpush1.msra.mxu0 0.0
    %576 = vmatprep.subr.mxu0 0.0
    %577 = vmatpush1.msra.mxu0 0.0
    %578 = vmatprep.subr.mxu0 0.0
    %579 = vmatpush1.msra.mxu0 0.0
    %580 = vmatprep.subr.mxu0 0.0
    %581 = vmatpush1.msra.mxu0 0.0
    %582 = vmatprep.subr.mxu0 0.0
    %583 = vmatpush1.msra.mxu0 0.0
    %584 = vmatprep.subr.mxu0 0.0
    %585 = vmatpush1.msra.mxu0 0.0
    %586 = vmatprep.subr.mxu0 0.0
    %587 = vmatpush1.msra.mxu0 0.0
    %588 = vmatprep.subr.mxu0 0.0
    %589 = vmatpush1.msra.mxu0 0.0
    %590 = vmatprep.subr.mxu0 0.0
    %591 = vmatpush1.msra.mxu0 0.0
    %592 = vmatprep.subr.mxu0 0.0
    %593 = vmatpush1.msra.mxu0 0.0
    %594 = vmatprep.subr.mxu0 0.0
    %595 = vmatpush1.msra.mxu0 0.0
    %596 = vmatprep.subr.mxu0 0.0
    %597 = vmatpush1.msra.mxu0 0.0
    %598 = vmatprep.subr.mxu0 0.0
    %599 = vmatpush1.msra.mxu0 0.0
    %600 = vmatprep.subr.mxu0 0.0
    %601 = vmatpush1.msra.mxu0 0.0
    %602 = vmatprep.subr.mxu0 0.0
    %603 = vmatpush1.msra.mxu0 0.0
    %604 = vmatprep.subr.mxu0 0.0
    %605 = vmatpush1.msra.mxu0 0.0
    %606 = vmatprep.subr.mxu0 0.0
    %607 = vmatpush1.msra.mxu0 0.0
    %608 = vmatprep.subr.mxu0 0.0
    %609 = vmatpush1.msra.mxu0 0.0
    %610 = vmatprep.subr.mxu0 0.0
    %611 = vmatpush1.msra.mxu0 0.0
    %612 = vmatprep.subr.mxu0 0.0
    %613 = vmatpush1.msra.mxu0 0.0
    %614 = vmatprep.subr.mxu0 0.0
    %615 = vmatpush1.msra.mxu0 0.0
    %616 = vmatprep.subr.mxu0 0.0
    %617 = vmatpush1.msra.mxu0 0.0
    %618 = vmatprep.subr.mxu0 0.0
    %619 = vmatpush1.msra.mxu0 0.0
    %620 = vmatprep.subr.mxu0 0.0
    %621 = vmatpush1.msra.mxu0 0.0
    %622 = vmatprep.subr.mxu0 0.0
    %623 = vmatpush1.msra.mxu0 0.0
    %624 = vmatprep.subr.mxu0 0.0
    %625 = vmatpush1.msra.mxu0 0.0
    %626 = vmatprep.mubr.f32.mxu0 0.0
    %627 = vmatmul.mubr.f32.gmra.mrb[0].mxu0 %v560
    %v628 = vpop.f32.mrb[0].mxu0
    %v629 = vadd.f32 0.0, %v628
    %v630 = vpop.f32.mrb[0].mxu0
    %631 = vdwg.mxu0
    %v633 = vrot.slane %v629, 2
    %v635 = vadd.f32 %v233, %v633
    %v636 = vxor.u32 %v635, 2147483648
    %v637 = vmul.f32 %v636, 1.442695
    %v638 = vpow.pop %v637
    %v639 = vadd.f32 %v638, 1.0
    %v640 = vrcp.pop %v639
    %v641 = vmul.f32 1.0, %v640
    %v642 = vtanh.pop %v635
    %v644 = vrot.slane %v549, 6
    %v646 = vmul.f32 %v641, %v644
    %648 = vrot.lane.b32.xlu0 %v642, 64
    %v649 = vpop.permute.xlu0 %648
    %v651 = vmul.f32 %v641, %v649
    %653 = vrot.lane.b32.xlu0 %v651, 32
    %v654 = vpop.permute.xlu0 %653
    %v656 = vadd.f32 %v646, %v654
    %v657 = vtanh.pop %v656
    %659 = vrot.lane.b32.xlu0 %v657, 64
    %v660 = vpop.permute.xlu0 %659
    %v662 = vmul.f32 %v641, %v660
    %v664 = vrot.slane %v662, 6
    %665 = vrot.lane.b32.xlu0 %v664, 32
    %v666 = vpop.permute.xlu0 %665
    %v667 = vsel %vm159, %v666, 0
    %669 = vmatprep.subr.mxu0 0.0
    %670 = vmatpush1.msra.mxu0 %v241
    %671 = vmatprep.subr.mxu0 0.0
    %672 = vmatpush1.msra.mxu0 %v242
    %673 = vmatprep.subr.mxu0 0.0
    %674 = vmatpush1.msra.mxu0 %v243
    %675 = vmatprep.subr.mxu0 0.0
    %676 = vmatpush1.msra.mxu0 %v244
    %677 = vmatprep.subr.mxu0 0.0
    %678 = vmatpush1.msra.mxu0 0.0
    %679 = vmatprep.subr.mxu0 0.0
    %680 = vmatpush1.msra.mxu0 0.0
    %681 = vmatprep.subr.mxu0 0.0
    %682 = vmatpush1.msra.mxu0 0.0
    %683 = vmatprep.subr.mxu0 0.0
    %684 = vmatpush1.msra.mxu0 0.0
    %685 = vmatprep.subr.mxu0 0.0
    %686 = vmatpush1.msra.mxu0 0.0
    %687 = vmatprep.subr.mxu0 0.0
    %688 = vmatpush1.msra.mxu0 0.0
    %689 = vmatprep.subr.mxu0 0.0
    %690 = vmatpush1.msra.mxu0 0.0
    %691 = vmatprep.subr.mxu0 0.0
    %692 = vmatpush1.msra.mxu0 0.0
    %693 = vmatprep.subr.mxu0 0.0
    %694 = vmatpush1.msra.mxu0 0.0
    %695 = vmatprep.subr.mxu0 0.0
    %696 = vmatpush1.msra.mxu0 0.0
    %697 = vmatprep.subr.mxu0 0.0
    %698 = vmatpush1.msra.mxu0 0.0
    %699 = vmatprep.subr.mxu0 0.0
    %700 = vmatpush1.msra.mxu0 0.0
    %701 = vmatprep.subr.mxu0 0.0
    %702 = vmatpush1.msra.mxu0 0.0
    %703 = vmatprep.subr.mxu0 0.0
    %704 = vmatpush1.msra.mxu0 0.0
    %705 = vmatprep.subr.mxu0 0.0
    %706 = vmatpush1.msra.mxu0 0.0
    %707 = vmatprep.subr.mxu0 0.0
    %708 = vmatpush1.msra.mxu0 0.0
    %709 = vmatprep.subr.mxu0 0.0
    %710 = vmatpush1.msra.mxu0 0.0
    %711 = vmatprep.subr.mxu0 0.0
    %712 = vmatpush1.msra.mxu0 0.0
    %713 = vmatprep.subr.mxu0 0.0
    %714 = vmatpush1.msra.mxu0 0.0
    %715 = vmatprep.subr.mxu0 0.0
    %716 = vmatpush1.msra.mxu0 0.0
    %717 = vmatprep.subr.mxu0 0.0
    %718 = vmatpush1.msra.mxu0 0.0
    %719 = vmatprep.subr.mxu0 0.0
    %720 = vmatpush1.msra.mxu0 0.0
    %721 = vmatprep.subr.mxu0 0.0
    %722 = vmatpush1.msra.mxu0 0.0
    %723 = vmatprep.subr.mxu0 0.0
    %724 = vmatpush1.msra.mxu0 0.0
    %725 = vmatprep.subr.mxu0 0.0
    %726 = vmatpush1.msra.mxu0 0.0
    %727 = vmatprep.subr.mxu0 0.0
    %728 = vmatpush1.msra.mxu0 0.0
    %729 = vmatprep.subr.mxu0 0.0
    %730 = vmatpush1.msra.mxu0 0.0
    %731 = vmatprep.subr.mxu0 0.0
    %732 = vmatpush1.msra.mxu0 0.0
    %733 = vmatprep.mubr.f32.mxu0 0.0
    %734 = vmatmul.mubr.f32.gmra.mrb[0].mxu0 %v667
    %v735 = vpop.f32.mrb[0].mxu0
    %v736 = vadd.f32 0.0, %v735
    %v737 = vpop.f32.mrb[0].mxu0
    %738 = vdwg.mxu0
    %v739 = vadd.f32 %v238, %v736
    %v740 = vxor.u32 %v739, 2147483648
    %v741 = vmul.f32 %v740, 1.442695
    %v742 = vpow.pop %v741
    %v743 = vadd.f32 %v742, 1.0
    %v744 = vrcp.pop %v743
    %v745 = vmul.f32 1.0, %v744
    %v746 = vtanh.pop %v739
    %v748 = vrot.slane %v656, 6
    %v750 = vmul.f32 %v745, %v748
    %752 = vrot.lane.b32.xlu0 %v746, 64
    %v753 = vpop.permute.xlu0 %752
    %v755 = vmul.f32 %v745, %v753
    %757 = vrot.lane.b32.xlu0 %v755, 32
    %v758 = vpop.permute.xlu0 %757
    %v760 = vadd.f32 %v750, %v758
    %v761 = vtanh.pop %v760
    %763 = vrot.lane.b32.xlu0 %v761, 64
    %v764 = vpop.permute.xlu0 %763
    %v766 = vmul.f32 %v745, %v764
    %768 = vrot.lane.b32.xlu0 %v766, 32
    %v769 = vpop.permute.xlu0 %768
    %v770 = vsel %vm159, %v769, 0
    %772 = vmatprep.subr.mxu0 0.0
    %773 = vmatpush1.msra.mxu0 %v241
    %774 = vmatprep.subr.mxu0 0.0
    %775 = vmatpush1.msra.mxu0 %v242
    %776 = vmatprep.subr.mxu0 0.0
    %777 = vmatpush1.msra.mxu0 %v243
    %778 = vmatprep.subr.mxu0 0.0
    %779 = vmatpush1.msra.mxu0 %v244
    %780 = vmatprep.subr.mxu0 0.0
    %781 = vmatpush1.msra.mxu0 0.0
    %782 = vmatprep.subr.mxu0 0.0
    %783 = vmatpush1.msra.mxu0 0.0
    %784 = vmatprep.subr.mxu0 0.0
    %785 = vmatpush1.msra.mxu0 0.0
    %786 = vmatprep.subr.mxu0 0.0
    %787 = vmatpush1.msra.mxu0 0.0
    %788 = vmatprep.subr.mxu0 0.0
    %789 = vmatpush1.msra.mxu0 0.0
    %790 = vmatprep.subr.mxu0 0.0
    %791 = vmatpush1.msra.mxu0 0.0
    %792 = vmatprep.subr.mxu0 0.0
    %793 = vmatpush1.msra.mxu0 0.0
    %794 = vmatprep.subr.mxu0 0.0
    %795 = vmatpush1.msra.mxu0 0.0
    %796 = vmatprep.subr.mxu0 0.0
    %797 = vmatpush1.msra.mxu0 0.0
    %798 = vmatprep.subr.mxu0 0.0
    %799 = vmatpush1.msra.mxu0 0.0
    %800 = vmatprep.subr.mxu0 0.0
    %801 = vmatpush1.msra.mxu0 0.0
    %802 = vmatprep.subr.mxu0 0.0
    %803 = vmatpush1.msra.mxu0 0.0
    %804 = vmatprep.subr.mxu0 0.0
    %805 = vmatpush1.msra.mxu0 0.0
    %806 = vmatprep.subr.mxu0 0.0
    %807 = vmatpush1.msra.mxu0 0.0
    %808 = vmatprep.subr.mxu0 0.0
    %809 = vmatpush1.msra.mxu0 0.0
    %810 = vmatprep.subr.mxu0 0.0
    %811 = vmatpush1.msra.mxu0 0.0
    %812 = vmatprep.subr.mxu0 0.0
    %813 = vmatpush1.msra.mxu0 0.0
    %814 = vmatprep.subr.mxu0 0.0
    %815 = vmatpush1.msra.mxu0 0.0
    %816 = vmatprep.subr.mxu0 0.0
    %817 = vmatpush1.msra.mxu0 0.0
    %818 = vmatprep.subr.mxu0 0.0
    %819 = vmatpush1.msra.mxu0 0.0
    %820 = vmatprep.subr.mxu0 0.0
    %821 = vmatpush1.msra.mxu0 0.0
    %822 = vmatprep.subr.mxu0 0.0
    %823 = vmatpush1.msra.mxu0 0.0
    %824 = vmatprep.subr.mxu0 0.0
    %825 = vmatpush1.msra.mxu0 0.0
    %826 = vmatprep.subr.mxu0 0.0
    %827 = vmatpush1.msra.mxu0 0.0
    %828 = vmatprep.subr.mxu0 0.0
    %829 = vmatpush1.msra.mxu0 0.0
    %830 = vmatprep.subr.mxu0 0.0
    %831 = vmatpush1.msra.mxu0 0.0
    %832 = vmatprep.subr.mxu0 0.0
    %833 = vmatpush1.msra.mxu0 0.0
    %834 = vmatprep.subr.mxu0 0.0
    %835 = vmatpush1.msra.mxu0 0.0
    %836 = vmatprep.mubr.f32.mxu0 0.0
    %837 = vmatmul.mubr.f32.gmra.mrb[0].mxu0 %v770
    %v838 = vpop.f32.mrb[0].mxu0
    %v839 = vadd.f32 0.0, %v838
    %v840 = vpop.f32.mrb[0].mxu0
    %841 = vdwg.mxu0
    %v843 = vrot.slane %v839, 6
    %v845 = vadd.f32 %v238, %v843
    %v846 = vxor.u32 %v845, 2147483648
    %v847 = vmul.f32 %v846, 1.442695
    %v848 = vpow.pop %v847
    %v849 = vadd.f32 %v848, 1.0
    %v850 = vrcp.pop %v849
    %v851 = vmul.f32 1.0, %v850
    %v852 = vtanh.pop %v845
    %v854 = vrot.slane %v760, 6
    %v856 = vmul.f32 %v851, %v854
    %858 = vrot.lane.b32.xlu0 %v852, 64
    %v859 = vpop.permute.xlu0 %858
    %v861 = vmul.f32 %v851, %v859
    %863 = vrot.lane.b32.xlu0 %v861, 32
    %v864 = vpop.permute.xlu0 %863
    %v866 = vadd.f32 %v856, %v864
    %v867 = vtanh.pop %v866
    %869 = vrot.lane.b32.xlu0 %v867, 64
    %v870 = vpop.permute.xlu0 %869
    %v872 = vmul.f32 %v851, %v870
    %v874 = vrot.slane %v872, 2
    %875 = vrot.lane.b32.xlu0 %v874, 32
    %v876 = vpop.permute.xlu0 %875
    %v877 = vsel %vm159, %v876, 0
    %879 = vmatprep.subr.mxu0 0.0
    %880 = vmatpush1.msra.mxu0 %v241
    %881 = vmatprep.subr.mxu0 0.0
    %882 = vmatpush1.msra.mxu0 %v242
    %883 = vmatprep.subr.mxu0 0.0
    %884 = vmatpush1.msra.mxu0 %v243
    %885 = vmatprep.subr.mxu0 0.0
    %886 = vmatpush1.msra.mxu0 %v244
    %887 = vmatprep.subr.mxu0 0.0
    %888 = vmatpush1.msra.mxu0 0.0
    %889 = vmatprep.subr.mxu0 0.0
    %890 = vmatpush1.msra.mxu0 0.0
    %891 = vmatprep.subr.mxu0 0.0
    %892 = vmatpush1.msra.mxu0 0.0
    %893 = vmatprep.subr.mxu0 0.0
    %894 = vmatpush1.msra.mxu0 0.0
    %895 = vmatprep.subr.mxu0 0.0
    %896 = vmatpush1.msra.mxu0 0.0
    %897 = vmatprep.subr.mxu0 0.0
    %898 = vmatpush1.msra.mxu0 0.0
    %899 = vmatprep.subr.mxu0 0.0
    %900 = vmatpush1.msra.mxu0 0.0
    %901 = vmatprep.subr.mxu0 0.0
    %902 = vmatpush1.msra.mxu0 0.0
    %903 = vmatprep.subr.mxu0 0.0
    %904 = vmatpush1.msra.mxu0 0.0
    %905 = vmatprep.subr.mxu0 0.0
    %906 = vmatpush1.msra.mxu0 0.0
    %907 = vmatprep.subr.mxu0 0.0
    %908 = vmatpush1.msra.mxu0 0.0
    %909 = vmatprep.subr.mxu0 0.0
    %910 = vmatpush1.msra.mxu0 0.0
    %911 = vmatprep.subr.mxu0 0.0
    %912 = vmatpush1.msra.mxu0 0.0
    %913 = vmatprep.subr.mxu0 0.0
    %914 = vmatpush1.msra.mxu0 0.0
    %915 = vmatprep.subr.mxu0 0.0
    %916 = vmatpush1.msra.mxu0 0.0
    %917 = vmatprep.subr.mxu0 0.0
    %918 = vmatpush1.msra.mxu0 0.0
    %919 = vmatprep.subr.mxu0 0.0
    %920 = vmatpush1.msra.mxu0 0.0
    %921 = vmatprep.subr.mxu0 0.0
    %922 = vmatpush1.msra.mxu0 0.0
    %923 = vmatprep.subr.mxu0 0.0
    %924 = vmatpush1.msra.mxu0 0.0
    %925 = vmatprep.subr.mxu0 0.0
    %926 = vmatpush1.msra.mxu0 0.0
    %927 = vmatprep.subr.mxu0 0.0
    %928 = vmatpush1.msra.mxu0 0.0
    %929 = vmatprep.subr.mxu0 0.0
    %930 = vmatpush1.msra.mxu0 0.0
    %931 = vmatprep.subr.mxu0 0.0
    %932 = vmatpush1.msra.mxu0 0.0
    %933 = vmatprep.subr.mxu0 0.0
    %934 = vmatpush1.msra.mxu0 0.0
    %935 = vmatprep.subr.mxu0 0.0
    %936 = vmatpush1.msra.mxu0 0.0
    %937 = vmatprep.subr.mxu0 0.0
    %938 = vmatpush1.msra.mxu0 0.0
    %939 = vmatprep.subr.mxu0 0.0
    %940 = vmatpush1.msra.mxu0 0.0
    %941 = vmatprep.subr.mxu0 0.0
    %942 = vmatpush1.msra.mxu0 0.0
    %943 = vmatprep.mubr.f32.mxu0 0.0
    %944 = vmatmul.mubr.f32.gmra.mrb[0].mxu0 %v877
    %v945 = vpop.f32.mrb[0].mxu0
    %v946 = vadd.f32 0.0, %v945
    %v947 = vpop.f32.mrb[0].mxu0
    %948 = vdwg.mxu0
    %v950 = vrot.slane %v946, 4
    %v952 = vadd.f32 %v238, %v950
    %v953 = vxor.u32 %v952, 2147483648
    %v954 = vmul.f32 %v953, 1.442695
    %v955 = vpow.pop %v954
    %v956 = vadd.f32 %v955, 1.0
    %v957 = vrcp.pop %v956
    %v958 = vmul.f32 1.0, %v957
    %v959 = vtanh.pop %v952
    %v961 = vrot.slane %v866, 6
    %v963 = vmul.f32 %v958, %v961
    %965 = vrot.lane.b32.xlu0 %v959, 64
    %v966 = vpop.permute.xlu0 %965
    %v968 = vmul.f32 %v958, %v966
    %970 = vrot.lane.b32.xlu0 %v968, 32
    %v971 = vpop.permute.xlu0 %970
    %v973 = vadd.f32 %v963, %v971
    %v974 = vtanh.pop %v973
    %976 = vrot.lane.b32.xlu0 %v974, 64
    %v977 = vpop.permute.xlu0 %976
    %v979 = vmul.f32 %v958, %v977
    %v981 = vrot.slane %v979, 4
    %982 = vrot.lane.b32.xlu0 %v981, 32
    %v983 = vpop.permute.xlu0 %982
    %v984 = vsel %vm159, %v983, 0
    %986 = vmatprep.subr.mxu0 0.0
    %987 = vmatpush1.msra.mxu0 %v241
    %988 = vmatprep.subr.mxu0 0.0
    %989 = vmatpush1.msra.mxu0 %v242
    %990 = vmatprep.subr.mxu0 0.0
    %991 = vmatpush1.msra.mxu0 %v243
    %992 = vmatprep.subr.mxu0 0.0
    %993 = vmatpush1.msra.mxu0 %v244
    %994 = vmatprep.subr.mxu0 0.0
    %995 = vmatpush1.msra.mxu0 0.0
    %996 = vmatprep.subr.mxu0 0.0
    %997 = vmatpush1.msra.mxu0 0.0
    %998 = vmatprep.subr.mxu0 0.0
    %999 = vmatpush1.msra.mxu0 0.0
    %1000 = vmatprep.subr.mxu0 0.0
    %1001 = vmatpush1.msra.mxu0 0.0
    %1002 = vmatprep.subr.mxu0 0.0
    %1003 = vmatpush1.msra.mxu0 0.0
    %1004 = vmatprep.subr.mxu0 0.0
    %1005 = vmatpush1.msra.mxu0 0.0
    %1006 = vmatprep.subr.mxu0 0.0
    %1007 = vmatpush1.msra.mxu0 0.0
    %1008 = vmatprep.subr.mxu0 0.0
    %1009 = vmatpush1.msra.mxu0 0.0
    %1010 = vmatprep.subr.mxu0 0.0
    %1011 = vmatpush1.msra.mxu0 0.0
    %1012 = vmatprep.subr.mxu0 0.0
    %1013 = vmatpush1.msra.mxu0 0.0
    %1014 = vmatprep.subr.mxu0 0.0
    %1015 = vmatpush1.msra.mxu0 0.0
    %1016 = vmatprep.subr.mxu0 0.0
    %1017 = vmatpush1.msra.mxu0 0.0
    %1018 = vmatprep.subr.mxu0 0.0
    %1019 = vmatpush1.msra.mxu0 0.0
    %1020 = vmatprep.subr.mxu0 0.0
    %1021 = vmatpush1.msra.mxu0 0.0
    %1022 = vmatprep.subr.mxu0 0.0
    %1023 = vmatpush1.msra.mxu0 0.0
    %1024 = vmatprep.subr.mxu0 0.0
    %1025 = vmatpush1.msra.mxu0 0.0
    %1026 = vmatprep.subr.mxu0 0.0
    %1027 = vmatpush1.msra.mxu0 0.0
    %1028 = vmatprep.subr.mxu0 0.0
    %1029 = vmatpush1.msra.mxu0 0.0
    %1030 = vmatprep.subr.mxu0 0.0
    %1031 = vmatpush1.msra.mxu0 0.0
    %1032 = vmatprep.subr.mxu0 0.0
    %1033 = vmatpush1.msra.mxu0 0.0
    %1034 = vmatprep.subr.mxu0 0.0
    %1035 = vmatpush1.msra.mxu0 0.0
    %1036 = vmatprep.subr.mxu0 0.0
    %1037 = vmatpush1.msra.mxu0 0.0
    %1038 = vmatprep.subr.mxu0 0.0
    %1039 = vmatpush1.msra.mxu0 0.0
    %1040 = vmatprep.subr.mxu0 0.0
    %1041 = vmatpush1.msra.mxu0 0.0
    %1042 = vmatprep.subr.mxu0 0.0
    %1043 = vmatpush1.msra.mxu0 0.0
    %1044 = vmatprep.subr.mxu0 0.0
    %1045 = vmatpush1.msra.mxu0 0.0
    %1046 = vmatprep.subr.mxu0 0.0
    %1047 = vmatpush1.msra.mxu0 0.0
    %1048 = vmatprep.subr.mxu0 0.0
    %1049 = vmatpush1.msra.mxu0 0.0
    %1050 = vmatprep.mubr.f32.mxu0 0.0
    %1051 = vmatmul.mubr.f32.gmra.mrb[0].mxu0 %v984
    %v1052 = vpop.f32.mrb[0].mxu0
    %v1053 = vadd.f32 0.0, %v1052
    %v1054 = vpop.f32.mrb[0].mxu0
    %1055 = vdwg.mxu0
    %v1057 = vrot.slane %v1053, 2
    %v1059 = vadd.f32 %v238, %v1057
    %v1060 = vxor.u32 %v1059, 2147483648
    %v1061 = vmul.f32 %v1060, 1.442695
    %v1062 = vpow.pop %v1061
    %v1063 = vadd.f32 %v1062, 1.0
    %v1064 = vrcp.pop %v1063
    %v1065 = vmul.f32 1.0, %v1064
    %v1066 = vtanh.pop %v1059
    %v1068 = vrot.slane %v973, 6
    %v1070 = vmul.f32 %v1065, %v1068
    %1072 = vrot.lane.b32.xlu0 %v1066, 64
    %v1073 = vpop.permute.xlu0 %1072
    %v1075 = vmul.f32 %v1065, %v1073
    %1077 = vrot.lane.b32.xlu0 %v1075, 32
    %v1078 = vpop.permute.xlu0 %1077
    %v1080 = vadd.f32 %v1070, %v1078
    %v1081 = vtanh.pop %v1080
    %1083 = vrot.lane.b32.xlu0 %v1081, 64
    %v1084 = vpop.permute.xlu0 %1083
    %v1086 = vmul.f32 %v1065, %v1084
    %1088 = vrot.lane.b32.xlu0 %v1086, 32
    %v1089 = vpop.permute.xlu0 %1088
    %vm1091 = vcmask 261126
    %v1092 = vsel %vm1091, %v1089, 0.0
    %1093 = vadd.xlane.f32.xlu0 %v1092
    %v1094 = vpop.xlane.xlu0 %1093
    %v1095 = vrcp.pop 32.0
    %v1096 = vmul.f32 %v1094, %v1095
    %v1097 = vsub.f32 %v1086, %v1096
    %v1098 = vmul.f32 %v1097, %v1097
    %1100 = vrot.lane.b32.xlu0 %v1098, 32
    %v1101 = vpop.permute.xlu0 %1100
    %v1103 = vsel %vm1091, %v1101, 0.0
    %1104 = vadd.xlane.f32.xlu0 %v1103
    %v1105 = vpop.xlane.xlu0 %1104
    %v1106 = vmul.f32 %v1105, %v1095
    %v1107 = vadd.f32 %v1106, 1e-05
    %v1108 = vrsqrt.pop %v1107
    %v1109 = vmul.f32 %v1097, %v1108
    %v1110 = vld [vmem:[%s5] sm:$0x1]
    %v1112 = vlaneseq
    %v1113 = vshrl.u32 %v1112, 7
    %v1114 = vsub.s32 0, %v1113
    %v1115 = vrot.slane %v1110, %v1114
    %1116 = vrot.lane.b32.xlu0 %v1115, 96
    %v1117 = vpop.permute.xlu0 %1116
    %v1119 = vmul.f32 %v1109, %v1117
    %v1120 = vld [vmem:[%s6] sm:$0x1]
    %v1122 = vlaneseq
    %v1123 = vshrl.u32 %v1122, 7
    %v1124 = vsub.s32 0, %v1123
    %v1125 = vrot.slane %v1120, %v1124
    %1126 = vrot.lane.b32.xlu0 %v1125, 96
    %v1127 = vpop.permute.xlu0 %1126
    %v1129 = vadd.f32 %v1119, %v1127
    %v1130 = vld [vmem:[%s7] sm:$0xff]
    %v1131 = vld [vmem:[%s7 + $0x8] sm:$0xff]
    %v1132 = vld [vmem:[%s7 + $0x10] sm:$0xff]
    %v1133 = vld [vmem:[%s7 + $0x18] sm:$0xff]
    %v1134 = vld [vmem:[%s8] sm:$0x1]
    %v1136 = vlaneseq
    %v1137 = vshrl.u32 %v1136, 7
    %v1138 = vsub.s32 0, %v1137
    %v1139 = vrot.slane %v1134, %v1138
    %v1142 = vrot.slane %v1129, 6
    %1143 = vrot.lane.b32.xlu0 %v1142, 32
    %v1144 = vpop.permute.xlu0 %1143
    %v1145 = vsel %vm159, %v1144, 0
    %1147 = vmatprep.subr.mxu0 0.0
    %1148 = vmatpush1.msra.mxu0 %v1130
    %1149 = vmatprep.subr.mxu0 0.0
    %1150 = vmatpush1.msra.mxu0 %v1131
    %1151 = vmatprep.subr.mxu0 0.0
    %1152 = vmatpush1.msra.mxu0 %v1132
    %1153 = vmatprep.subr.mxu0 0.0
    %1154 = vmatpush1.msra.mxu0 %v1133
    %1155 = vmatprep.subr.mxu0 0.0
    %1156 = vmatpush1.msra.mxu0 0.0
    %1157 = vmatprep.subr.mxu0 0.0
    %1158 = vmatpush1.msra.mxu0 0.0
    %1159 = vmatprep.subr.mxu0 0.0
    %1160 = vmatpush1.msra.mxu0 0.0
    %1161 = vmatprep.subr.mxu0 0.0
    %1162 = vmatpush1.msra.mxu0 0.0
    %1163 = vmatprep.subr.mxu0 0.0
    %1164 = vmatpush1.msra.mxu0 0.0
    %1165 = vmatprep.subr.mxu0 0.0
    %1166 = vmatpush1.msra.mxu0 0.0
    %1167 = vmatprep.subr.mxu0 0.0
    %1168 = vmatpush1.msra.mxu0 0.0
    %1169 = vmatprep.subr.mxu0 0.0
    %1170 = vmatpush1.msra.mxu0 0.0
    %1171 = vmatprep.subr.mxu0 0.0
    %1172 = vmatpush1.msra.mxu0 0.0
    %1173 = vmatprep.subr.mxu0 0.0
    %1174 = vmatpush1.msra.mxu0 0.0
    %1175 = vmatprep.subr.mxu0 0.0
    %1176 = vmatpush1.msra.mxu0 0.0
    %1177 = vmatprep.subr.mxu0 0.0
    %1178 = vmatpush1.msra.mxu0 0.0
    %1179 = vmatprep.subr.mxu0 0.0
    %1180 = vmatpush1.msra.mxu0 0.0
    %1181 = vmatprep.subr.mxu0 0.0
    %1182 = vmatpush1.msra.mxu0 0.0
    %1183 = vmatprep.subr.mxu0 0.0
    %1184 = vmatpush1.msra.mxu0 0.0
    %1185 = vmatprep.subr.mxu0 0.0
    %1186 = vmatpush1.msra.mxu0 0.0
    %1187 = vmatprep.subr.mxu0 0.0
    %1188 = vmatpush1.msra.mxu0 0.0
    %1189 = vmatprep.subr.mxu0 0.0
    %1190 = vmatpush1.msra.mxu0 0.0
    %1191 = vmatprep.subr.mxu0 0.0
    %1192 = vmatpush1.msra.mxu0 0.0
    %1193 = vmatprep.subr.mxu0 0.0
    %1194 = vmatpush1.msra.mxu0 0.0
    %1195 = vmatprep.subr.mxu0 0.0
    %1196 = vmatpush1.msra.mxu0 0.0
    %1197 = vmatprep.subr.mxu0 0.0
    %1198 = vmatpush1.msra.mxu0 0.0
    %1199 = vmatprep.subr.mxu0 0.0
    %1200 = vmatpush1.msra.mxu0 0.0
    %1201 = vmatprep.subr.mxu0 0.0
    %1202 = vmatpush1.msra.mxu0 0.0
    %1203 = vmatprep.subr.mxu0 0.0
    %1204 = vmatpush1.msra.mxu0 0.0
    %1205 = vmatprep.subr.mxu0 0.0
    %1206 = vmatpush1.msra.mxu0 0.0
    %1207 = vmatprep.subr.mxu0 0.0
    %1208 = vmatpush1.msra.mxu0 0.0
    %1209 = vmatprep.subr.mxu0 0.0
    %1210 = vmatpush1.msra.mxu0 0.0
    %1211 = vmatprep.mubr.f32.mxu0 0.0
    %1212 = vmatmul.mubr.f32.gmra.mrb[0].mxu0 %v1145
    %v1213 = vpop.f32.mrb[0].mxu0
    %v1214 = vadd.f32 %v1139, %v1213
    %v1215 = vpop.f32.mrb[0].mxu0
    %1216 = vdwg.mxu0
    %v1217 = vmax.f32 %v1214, 0.0
    %v1218 = vld [vmem:[%s9] sm:$0xff]
    %v1219 = vld [vmem:[%s9 + $0x8] sm:$0xff]
    %v1220 = vld [vmem:[%s9 + $0x10] sm:$0xff]
    %v1221 = vld [vmem:[%s9 + $0x18] sm:$0xff]
    %v1222 = vld [vmem:[%s10] sm:$0x1]
    %v1224 = vlaneseq
    %v1225 = vshrl.u32 %v1224, 7
    %v1226 = vsub.s32 0, %v1225
    %v1227 = vrot.slane %v1222, %v1226
    %v1230 = vsel %vm159, %v1217, 0
    %1232 = vmatprep.subr.mxu0 0.0
    %1233 = vmatpush1.msra.mxu0 %v1218
    %1234 = vmatprep.subr.mxu0 0.0
    %1235 = vmatpush1.msra.mxu0 %v1219
    %1236 = vmatprep.subr.mxu0 0.0
    %1237 = vmatpush1.msra.mxu0 %v1220
    %1238 = vmatprep.subr.mxu0 0.0
    %1239 = vmatpush1.msra.mxu0 %v1221
    %1240 = vmatprep.subr.mxu0 0.0
    %1241 = vmatpush1.msra.mxu0 0.0
    %1242 = vmatprep.subr.mxu0 0.0
    %1243 = vmatpush1.msra.mxu0 0.0
    %1244 = vmatprep.subr.mxu0 0.0
    %1245 = vmatpush1.msra.mxu0 0.0
    %1246 = vmatprep.subr.mxu0 0.0
    %1247 = vmatpush1.msra.mxu0 0.0
    %1248 = vmatprep.subr.mxu0 0.0
    %1249 = vmatpush1.msra.mxu0 0.0
    %1250 = vmatprep.subr.mxu0 0.0
    %1251 = vmatpush1.msra.mxu0 0.0
    %1252 = vmatprep.subr.mxu0 0.0
    %1253 = vmatpush1.msra.mxu0 0.0
    %1254 = vmatprep.subr.mxu0 0.0
    %1255 = vmatpush1.msra.mxu0 0.0
    %1256 = vmatprep.subr.mxu0 0.0
    %1257 = vmatpush1.msra.mxu0 0.0
    %1258 = vmatprep.subr.mxu0 0.0
    %1259 = vmatpush1.msra.mxu0 0.0
    %1260 = vmatprep.subr.mxu0 0.0
    %1261 = vmatpush1.msra.mxu0 0.0
    %1262 = vmatprep.subr.mxu0 0.0
    %1263 = vmatpush1.msra.mxu0 0.0
    %1264 = vmatprep.subr.mxu0 0.0
    %1265 = vmatpush1.msra.mxu0 0.0
    %1266 = vmatprep.subr.mxu0 0.0
    %1267 = vmatpush1.msra.mxu0 0.0
    %1268 = vmatprep.subr.mxu0 0.0
    %1269 = vmatpush1.msra.mxu0 0.0
    %1270 = vmatprep.subr.mxu0 0.0
    %1271 = vmatpush1.msra.mxu0 0.0
    %1272 = vmatprep.subr.mxu0 0.0
    %1273 = vmatpush1.msra.mxu0 0.0
    %1274 = vmatprep.subr.mxu0 0.0
    %1275 = vmatpush1.msra.mxu0 0.0
    %1276 = vmatprep.subr.mxu0 0.0
    %1277 = vmatpush1.msra.mxu0 0.0
    %1278 = vmatprep.subr.mxu0 0.0
    %1279 = vmatpush1.msra.mxu0 0.0
    %1280 = vmatprep.subr.mxu0 0.0
    %1281 = vmatpush1.msra.mxu0 0.0
    %1282 = vmatprep.subr.mxu0 0.0
    %1283 = vmatpush1.msra.mxu0 0.0
    %1284 = vmatprep.subr.mxu0 0.0
    %1285 = vmatpush1.msra.mxu0 0.0
    %1286 = vmatprep.subr.mxu0 0.0
    %1287 = vmatpush1.msra.mxu0 0.0
    %1288 = vmatprep.subr.mxu0 0.0
    %1289 = vmatpush1.msra.mxu0 0.0
    %1290 = vmatprep.subr.mxu0 0.0
    %1291 = vmatpush1.msra.mxu0 0.0
    %1292 = vmatprep.subr.mxu0 0.0
    %1293 = vmatpush1.msra.mxu0 0.0
    %1294 = vmatprep.subr.mxu0 0.0
    %1295 = vmatpush1.msra.mxu0 0.0
    %1296 = vmatprep.mubr.f32.mxu0 0.0
    %1297 = vmatmul.mubr.f32.gmra.mrb[0].mxu0 %v1230
    %v1298 = vpop.f32.mrb[0].mxu0
    %v1299 = vadd.f32 %v1227, %v1298
    %v1300 = vpop.f32.mrb[0].mxu0
    %1301 = vdwg.mxu0
    %vm1302 = vcmask 74752
    %1303 = vst.msk [vmem:[#allocation2] sm:$0x3] %vm1302, %v1299
    // Predicated region
    $region46: #{tpu_custom_call.1} parent=1 // pred_check
      _
    $region47: #{tpu_custom_call.1} parent=1 // pred_check_branch
      %1305 = sbr.rel (0) target = $region49
    $region48: #{tpu_custom_call.1} parent=1 // pred_region
      %s1307 = ssub.s32 32, 32
      %1308 = vsyncadd [#allocation3], %s1307
      %s1310 = sshll.u32 [#allocation2], 4
      %s1311 = int_to_ptr.vmem [resolvable:$true] %s1310
      %1313 = dma.vmem_to_hbm [thread:$0]  %s1311, 32, %s11, [#allocation3]
    $region49: #{tpu_custom_call.1} parent=1 // pred_fallthru
      _
    // Predicated region
    $region50: #{tpu_custom_call.1} parent=1 // pred_check
      _
    $region51: #{tpu_custom_call.1} parent=1 // pred_check_branch
      %1315 = sbr.rel (0) target = $region53
    $region52: #{tpu_custom_call.1} parent=1 // pred_region
      %1316 = dma.done [#allocation3], 32
    $region53: #{tpu_custom_call.1} parent=1 // pred_fallthru
      _
    %1317 = vsyncpa [#allocation3], 1

</llo_original>
